<compile_context>
chip_gen: v7x
topology: tpu7x:2x2x1
jax: 0.10.0
libtpu: 0.0.40
codegen_flags: <defaults>
</compile_context>

<pallas_src>
import functools

import jax
import jax.numpy as jnp
import numpy as np
from jax import lax
from jax.experimental import pallas as pl
from jax.experimental.pallas import tpu as pltpu

_F32 = jnp.float32
_HIGHEST = lax.Precision.HIGHEST
_LOG_EPS40 = float(np.log(1e-40))          # reference's log(epsilon) floor
_VMEM_BUDGET = 26 * 1024 * 1024            # conservative per-step budget (all gens)


def _round_up(x, m):
    return ((x + m - 1) // m) * m


def _cdiv(a, b):
    return -(-a // b)


# ---------------------------------------------------------------------------
# Kernel bodies
# ---------------------------------------------------------------------------
def _rbrs_core(gu, gi, exp_gr, w_mat, s_mat, logvar_ref, xui_ref, *, wide_bf16):
    """Shared math; gu/gi are (TB, K) f32 values already in vregs."""
    R = exp_gr.shape[0]

    # scores[b, r] = sum_k gu[b, k] * exp(0.5 * Gr[r, k])  (contract K of both).
    scores = lax.dot_general(gu, exp_gr,
                             dimension_numbers=(((1,), (1,)), ((), ())),
                             precision=_HIGHEST,
                             preferred_element_type=_F32)              # (TB, R)

    # Softmax over rules (exact division: s_jk feeds the logvar output).
    m = jnp.max(scores, axis=1, keepdims=True)
    e = jnp.exp(scores - m)
    s_jk = e / jnp.sum(e, axis=1, keepdims=True)                       # (TB, R)

    # Lane-dense logvar[b, r*K+k] = s_jk[b, r] * Gr[r, k] via the MXU with
    # W[r, r*K+k] = Gr[r, k].  HIGHEST precision so the single-product result
    # matches the reference's f32 elementwise multiply.
    logvar2d = jnp.dot(s_jk, w_mat, precision=_HIGHEST,
                       preferred_element_type=_F32)                    # (TB, RK)
    logvar_ref[...] = logvar2d

    # and_scores[b, r] = (gu . gi)[b] + sum_k exp(0.5*logvar[b,r,k]) * gi[b,k]
    # Wide (TB, RK) path optionally in bf16 (v6e/v7x have bf16 VPU/EUP).
    cdt = jnp.bfloat16 if wide_bf16 else _F32
    std2d = jnp.exp((0.5 * logvar2d).astype(cdt))                      # EUP
    gi_rep = jnp.concatenate([gi.astype(cdt)] * R, axis=1)             # lane tiling
    part = jnp.dot(std2d * gi_rep, s_mat.astype(cdt),
                   preferred_element_type=_F32)                        # (TB, R)
    gug = jnp.sum(gu * gi, axis=1, keepdims=True)                      # (TB, 1)
    and_scores = part + gug                                            # (TB, R)

    # disjunction(1, sigmoid(x)): log(1 - sigmoid(x) + 1e-40)
    #   == max(-softplus(x), log(1e-40)) in exact math; the clamp preserves the
    #   epsilon floor for huge scores.  (Intentionally does not reproduce the
    #   reference's f32 sigmoid-saturation artifact for 17 < x < 92.)
    sp = jnp.maximum(and_scores, 0.0) + jnp.log(1.0 + jnp.exp(-jnp.abs(and_scores)))
    log_term = jnp.maximum(-sp, _LOG_EPS40)
    log_sum = jnp.sum(log_term, axis=1, keepdims=True)                 # (TB, 1)
    xui_ref[...] = 1.0 - (-1.0 / (-1.0 + log_sum))


def _kernel_pregathered(gu_ref, gi_ref, exp_gr_ref, w_ref, s_ref,
                        logvar_ref, xui_ref, *, wide_bf16):
    _rbrs_core(gu_ref[...], gi_ref[...], exp_gr_ref[...], w_ref[...], s_ref[...],
               logvar_ref, xui_ref, wide_bf16=wide_bf16)


def _kernel_fused_gather(uid_ref, iid_ref, gu_tab_ref, gi_tab_ref, exp_gr_ref,
                         w_ref, s_ref, logvar_ref, xui_ref, gu_out_ref, *,
                         wide_bf16):
    # In-kernel embedding gather: one-hot @ table on the MXU.  HIGHEST
    # precision reconstructs the f32 rows exactly (~1 ulp).  Tables stay
    # VMEM-resident across grid steps, so gathered activations never
    # round-trip through HBM.
    tb = uid_ref.shape[0]
    n_u = gu_tab_ref.shape[0]
    n_i = gi_tab_ref.shape[0]
    u_oh = (uid_ref[...] == lax.broadcasted_iota(jnp.int32, (tb, n_u), 1)).astype(_F32)
    i_oh = (iid_ref[...] == lax.broadcasted_iota(jnp.int32, (tb, n_i), 1)).astype(_F32)
    gu = jnp.dot(u_oh, gu_tab_ref[...], precision=_HIGHEST,
                 preferred_element_type=_F32)                          # (TB, K)
    gi = jnp.dot(i_oh, gi_tab_ref[...], precision=_HIGHEST,
                 preferred_element_type=_F32)                          # (TB, K)
    gu_out_ref[...] = gu
    _rbrs_core(gu, gi, exp_gr_ref[...], w_ref[...], s_ref[...],
               logvar_ref, xui_ref, wide_bf16=wide_bf16)


# ---------------------------------------------------------------------------
# Tiling / VMEM budgeting helpers
# ---------------------------------------------------------------------------
def _choose_tb(B, tile_b):
    tb_cap = max(8, _round_up(min(int(tile_b), 4096), 8))
    if B <= 512:
        # Small batches: one (or a few) tiles; per-step overhead dominates
        # otherwise and there is not enough work to split across cores.
        return min(tb_cap, _round_up(max(B, 8), 8))
    # Large batches: never a single tile (v7x has two TensorCores); prefer an
    # even tile count so the two cores stay balanced.
    tb = min(tb_cap, _round_up(_cdiv(B, 2), 8))
    n = _cdiv(B, tb)
    if n % 2 == 1 and n > 1:
        tb = min(tb_cap, _round_up(_cdiv(B, n + 1), 8))
    return max(8, tb)


def _vmem_bytes(tb, K, R, RK, n_u, n_i, fused_gather, wide_bf16):
    f = 4
    w = 2 if wide_bf16 else 4
    b = 2 * (tb * RK + tb) * f                    # logvar + xui outputs (x2 buffers)
    if fused_gather:
        b += 2 * tb * K * f                       # gathered gu output block
        b += 2 * 2 * tb * 4                       # user/item index blocks
        b += 2 * (n_u + n_i) * K * f              # resident embedding tables
        b += tb * (n_u + n_i) * f                 # one-hot temporaries
    else:
        b += 2 * 2 * tb * K * f                   # gu / gi input blocks
    b += 2 * (R * K + R * RK + RK * R) * f        # exp_gr, W, S (resident)
    b += tb * RK * f                              # logvar2d
    b += 3 * tb * RK * w                          # std2d, gi_rep, product
    b += 6 * tb * R * f                           # scores / softmax / and_scores
    return b


# ---------------------------------------------------------------------------
# Forward wrapper
# ---------------------------------------------------------------------------
def rbrsintvar_forward(users, items, Gu_mean, Gi, Gr, *, tile_b=2048,
                       wide_bf16=False, fuse_gather_max_rows=256):
    """Returns (xui, gu_mean, gu_logvar) matching RBRSINTVARModel.forward."""
    B = int(users.shape[0])
    n_users, K = Gu_mean.shape
    n_items = Gi.shape[0]
    R = Gr.shape[0]
    RK = R * K

    fused_gather = (n_users <= fuse_gather_max_rows
                    and n_items <= fuse_gather_max_rows)

    # Batch tile: big tiles amortize the ~0.35us/step pipeline overhead; the
    # VMEM budget keeps the tile valid across v5e / v6e / v7x.
    TB = _choose_tb(B, tile_b)
    while TB > 64 and _vmem_bytes(TB, K, R, RK, n_users, n_items,
                                  fused_gather, wide_bf16) > _VMEM_BUDGET:
        TB = max(64, _round_up(TB // 2, 8))
    B_pad = _round_up(B, TB)
    n_tiles = B_pad // TB

    vmem_need = _vmem_bytes(TB, K, R, RK, n_users, n_items, fused_gather, wide_bf16)
    vmem_limit = int(min(56 * 2 ** 20, max(32 * 2 ** 20, 2 * vmem_need)))
    compiler_params = pltpu.CompilerParams(
        dimension_semantics=("parallel",), vmem_limit_bytes=vmem_limit)

    # Rule-side constants hoisted out of the kernel (all VMEM-resident):
    #   exp_gr          = exp(0.5 * Gr)
    #   W[r, r*K + k]   = Gr[r, k]       (s_jk @ W -> lane-dense s_jk * Gr)
    #   S[r*K + k, r']  = delta(r, r')   (per-rule segment-sum over K)
    gr = Gr.astype(_F32)
    exp_gr = jnp.exp(0.5 * gr)
    eye_r = jnp.eye(R, dtype=_F32)
    w_mat = (eye_r[:, :, None] * gr[None, :, :]).reshape(R, RK)
    s_mat = jnp.broadcast_to(eye_r[:, None, :], (R, K, R)).reshape(RK, R)

    users_p = jnp.pad(users.astype(jnp.int32), (0, B_pad - B))
    items_p = jnp.pad(items.astype(jnp.int32), (0, B_pad - B))

    flops = int(2 * B_pad * (K * R + R * RK + RK * R) + 10 * B_pad * RK
                + (2 * B_pad * (n_users + n_items) * K if fused_gather else 0))
    transcendentals = int(B_pad * (RK + 4 * R))

    if fused_gather:
        bytes_accessed = int(4 * (B_pad * (RK + K + 3)
                                  + (n_users + n_items) * K
                                  + R * K + R * RK + RK * R))
        kernel = functools.partial(_kernel_fused_gather, wide_bf16=wide_bf16)
        logvar2d, xui2d, gu_pad = pl.pallas_call(
            kernel,
            out_shape=(jax.ShapeDtypeStruct((B_pad, RK), _F32),
                       jax.ShapeDtypeStruct((B_pad, 1), _F32),
                       jax.ShapeDtypeStruct((B_pad, K), _F32)),
            grid=(n_tiles,),
            in_specs=[
                pl.BlockSpec((TB, 1), lambda i: (i, 0)),        # user ids
                pl.BlockSpec((TB, 1), lambda i: (i, 0)),        # item ids
                pl.BlockSpec((n_users, K), lambda i: (0, 0)),   # Gu table (resident)
                pl.BlockSpec((n_items, K), lambda i: (0, 0)),   # Gi table (resident)
                pl.BlockSpec((R, K), lambda i: (0, 0)),         # exp(0.5*Gr)
                pl.BlockSpec((R, RK), lambda i: (0, 0)),        # W
                pl.BlockSpec((RK, R), lambda i: (0, 0)),        # S
            ],
            out_specs=(
                pl.BlockSpec((TB, RK), lambda i: (i, 0)),       # lane-dense logvar
                pl.BlockSpec((TB, 1), lambda i: (i, 0)),        # xui
                pl.BlockSpec((TB, K), lambda i: (i, 0)),        # gathered gu_mean
            ),
            compiler_params=compiler_params,
            cost_estimate=pl.CostEstimate(flops=flops,
                                          transcendentals=transcendentals,
                                          bytes_accessed=bytes_accessed),
        )(users_p[:, None], items_p[:, None],
          Gu_mean.astype(_F32), Gi.astype(_F32), exp_gr, w_mat, s_mat)
        gu_mean = gu_pad[:B]
    else:
        # Fallback for embedding tables too large for VMEM residency.
        # TODO(synk): fold this gather into the kernel operand via
        # CompilerParams(allow_input_fusion=...) once validated on the target
        # runtime; kept as plain-JAX glue here to guarantee a clean run.
        gu_mean_p = Gu_mean[users_p].astype(_F32)
        gamma_i_p = Gi[items_p].astype(_F32)
        bytes_accessed = int(4 * (B_pad * (RK + 2 * K + 1)
                                  + R * K + R * RK + RK * R))
        kernel = functools.partial(_kernel_pregathered, wide_bf16=wide_bf16)
        logvar2d, xui2d = pl.pallas_call(
            kernel,
            out_shape=(jax.ShapeDtypeStruct((B_pad, RK), _F32),
                       jax.ShapeDtypeStruct((B_pad, 1), _F32)),
            grid=(n_tiles,),
            in_specs=[
                pl.BlockSpec((TB, K), lambda i: (i, 0)),        # gu_mean tile
                pl.BlockSpec((TB, K), lambda i: (i, 0)),        # gamma_i tile
                pl.BlockSpec((R, K), lambda i: (0, 0)),         # exp(0.5*Gr)
                pl.BlockSpec((R, RK), lambda i: (0, 0)),        # W
                pl.BlockSpec((RK, R), lambda i: (0, 0)),        # S
            ],
            out_specs=(
                pl.BlockSpec((TB, RK), lambda i: (i, 0)),
                pl.BlockSpec((TB, 1), lambda i: (i, 0)),
            ),
            compiler_params=compiler_params,
            cost_estimate=pl.CostEstimate(flops=flops,
                                          transcendentals=transcendentals,
                                          bytes_accessed=bytes_accessed),
        )(gu_mean_p, gamma_i_p, exp_gr, w_mat, s_mat)
        gu_mean = gu_mean_p[:B]

    xui = xui2d[:B, 0]                            # (B,)
    gu_logvar = logvar2d[:B].reshape(B, R, K)     # free row-major reshape
    return xui, gu_mean, gu_logvar


# ---------------------------------------------------------------------------
# Reference, checks, demo
# ---------------------------------------------------------------------------
def _xavier_uniform(key, shape):
    fan_out, fan_in = shape[0], shape[1]
    bound = np.sqrt(6.0 / (fan_in + fan_out))
    return jax.random.uniform(key, shape, jnp.float32, -bound, bound)


def _reference_forward(users, items, Gu_mean, Gi, Gr):
    # Pure-JAX reference of the PyTorch forward (f32 elementwise math).
    gu = Gu_mean[users]
    gi = Gi[items]
    exp_gr = jnp.exp(0.5 * Gr)
    scores = jnp.sum(gu[:, None, :] * exp_gr[None, :, :], axis=-1)
    s = jax.nn.softmax(scores, axis=1)
    logvar = s[:, :, None] * Gr[None, :, :]
    e_ujk = gu[:, None, :] + jnp.exp(0.5 * logvar)
    and_scores = jnp.sum(e_ujk * gi[:, None, :], axis=2)
    a = jax.nn.sigmoid(and_scores)
    log_sum = jnp.sum(jnp.log(1.0 - a + 1e-40), axis=1)
    xui = 1.0 - (-1.0 / (-1.0 + log_sum))
    return xui, gu, logvar


def _check(users, items, Gu_mean, Gi, Gr, *, xui_rtol=1e-4, xui_atol=1e-5,
           **fwd_kwargs):
    out = rbrsintvar_forward(users, items, Gu_mean, Gi, Gr, **fwd_kwargs)
    jax.block_until_ready(out)
    xui, gu_mean, gu_logvar = out
    xui_r, gu_r, lv_r = _reference_forward(users, items, Gu_mean, Gi, Gr)
    np.testing.assert_allclose(np.asarray(xui), np.asarray(xui_r),
                               rtol=xui_rtol, atol=xui_atol)
    np.testing.assert_allclose(np.asarray(gu_mean), np.asarray(gu_r),
                               rtol=1e-5, atol=1e-6)
    np.testing.assert_allclose(np.asarray(gu_logvar), np.asarray(lv_r),
                               rtol=1e-4, atol=1e-5)


if __name__ == "__main__":
    # Small shapes consistent with the module's __init__.
    num_users, num_items = 16, 12
    embed_k = 32          # K
    n_rules = 8           # R  (R*K = 256 lane-dense logvar columns)

    key = jax.random.PRNGKey(0)
    keys = jax.random.split(key, 9)

    Gu_mean = _xavier_uniform(keys[0], (num_users, embed_k))
    Gr = _xavier_uniform(keys[1], (n_rules, embed_k))
    Gi = _xavier_uniform(keys[2], (num_items, embed_k))

    # Case 1: tiny single-tile launch (B=8), fused in-kernel gather path.
    u1 = jax.random.randint(keys[3], (8,), 0, num_users, dtype=jnp.int32)
    i1 = jax.random.randint(keys[4], (8,), 0, num_items, dtype=jnp.int32)
    _check(u1, i1, Gu_mean, Gi, Gr)

    # Case 2: batch grid + padding (B=40, TB=16, 3 tiles); also exercise the
    # wrapper-gather fallback path (as used for large embedding tables).
    u2 = jax.random.randint(keys[5], (40,), 0, num_users, dtype=jnp.int32)
    i2 = jax.random.randint(keys[6], (40,), 0, num_items, dtype=jnp.int32)
    _check(u2, i2, Gu_mean, Gi, Gr, tile_b=16)
    _check(u2, i2, Gu_mean, Gi, Gr, tile_b=16, fuse_gather_max_rows=0)

    # Case 3: larger batch (B=1600) -> >=2 even tiles (v7x dual-core split);
    # also run the optional bf16 wide path (v6e/v7x) with looser xui tolerance.
    u3 = jax.random.randint(keys[7], (1600,), 0, num_users, dtype=jnp.int32)
    i3 = jax.random.randint(keys[8], (1600,), 0, num_items, dtype=jnp.int32)
    _check(u3, i3, Gu_mean, Gi, Gr)
    _check(u3, i3, Gu_mean, Gi, Gr, wide_bf16=True,
           xui_rtol=1e-2, xui_atol=2e-3)

    print("KERNEL_OK")
</pallas_src>

<mosaic_0001>
module attributes {stable_mosaic.version = 11 : i64} {
  func.func @_kernel_fused_gather(%arg0: i32, %arg1: memref<8x1xi32, #tpu.memory_space<vmem>>, %arg2: memref<8x1xi32, #tpu.memory_space<vmem>>, %arg3: memref<16x32xf32, #tpu.memory_space<vmem>>, %arg4: memref<12x32xf32, #tpu.memory_space<vmem>>, %arg5: memref<8x32xf32, #tpu.memory_space<vmem>>, %arg6: memref<8x256xf32, #tpu.memory_space<vmem>>, %arg7: memref<256x8xf32, #tpu.memory_space<vmem>>, %arg8: memref<8x256xf32, #tpu.memory_space<vmem>>, %arg9: memref<8x1xf32, #tpu.memory_space<vmem>>, %arg10: memref<8x32xf32, #tpu.memory_space<vmem>>) attributes {dimension_semantics = [#tpu.dimension_semantics<parallel>], iteration_bounds = array<i64: 1>, scalar_prefetch = 0 : i64, scratch_operands = 0 : i64, tpu.core_type = #tpu.core_type<tc>, window_params = [{transform_indices = @transform_0, window_bounds = array<i64: 8, 1>}, {transform_indices = @transform_1, window_bounds = array<i64: 8, 1>}, {pipeline_mode = #tpu.pipeline_mode<synchronous>, transform_indices = @transform_2, window_bounds = array<i64: 16, 32>}, {pipeline_mode = #tpu.pipeline_mode<synchronous>, transform_indices = @transform_3, window_bounds = array<i64: 12, 32>}, {pipeline_mode = #tpu.pipeline_mode<synchronous>, transform_indices = @transform_4, window_bounds = array<i64: 8, 32>}, {pipeline_mode = #tpu.pipeline_mode<synchronous>, transform_indices = @transform_5, window_bounds = array<i64: 8, 256>}, {pipeline_mode = #tpu.pipeline_mode<synchronous>, transform_indices = @transform_6, window_bounds = array<i64: 256, 8>}, {transform_indices = @transform_7, window_bounds = array<i64: 8, 256>}, {transform_indices = @transform_8, window_bounds = array<i64: 8, 1>}, {transform_indices = @transform_9, window_bounds = array<i64: 8, 32>}]} {
    %c0 = arith.constant 0 : index
    %c0_0 = arith.constant 0 : index
    %0 = vector.load %arg1[%c0, %c0_0] : memref<8x1xi32, #tpu.memory_space<vmem>>, vector<8x1xi32>
    %1 = tpu.iota {dimensions = array<i32: 1>} : vector<8x16xi32>
    %2 = vector.broadcast %0 : vector<8x1xi32> to vector<8x16xi32>
    %3 = arith.cmpi eq, %2, %1 : vector<8x16xi32>
    %4 = arith.extui %3 : vector<8x16xi1> to vector<8x16xi32>
    %5 = arith.sitofp %4 : vector<8x16xi32> to vector<8x16xf32>
    %c0_1 = arith.constant 0 : index
    %c0_2 = arith.constant 0 : index
    %6 = vector.load %arg2[%c0_1, %c0_2] : memref<8x1xi32, #tpu.memory_space<vmem>>, vector<8x1xi32>
    %7 = tpu.iota {dimensions = array<i32: 1>} : vector<8x12xi32>
    %8 = vector.broadcast %6 : vector<8x1xi32> to vector<8x12xi32>
    %9 = arith.cmpi eq, %8, %7 : vector<8x12xi32>
    %10 = arith.extui %9 : vector<8x12xi1> to vector<8x12xi32>
    %11 = arith.sitofp %10 : vector<8x12xi32> to vector<8x12xf32>
    %c0_3 = arith.constant 0 : index
    %c0_4 = arith.constant 0 : index
    %12 = vector.load %arg3[%c0_3, %c0_4] : memref<16x32xf32, #tpu.memory_space<vmem>>, vector<16x32xf32>
    %cst = arith.constant dense<0.000000e+00> : vector<8x32xf32>
    %13 = tpu.matmul %5, %12, %cst {dimension_numbers = #tpu.dot_dimension_numbers<[1], [0], [0], [1], [0, 0, 1, 1], [], []>, precision = #tpu.contract_precision<fp32>} : vector<8x16xf32>, vector<16x32xf32>, vector<8x32xf32> -> vector<8x32xf32>
    %c0_5 = arith.constant 0 : index
    %c0_6 = arith.constant 0 : index
    %14 = vector.load %arg4[%c0_5, %c0_6] : memref<12x32xf32, #tpu.memory_space<vmem>>, vector<12x32xf32>
    %cst_7 = arith.constant dense<0.000000e+00> : vector<8x32xf32>
    %15 = tpu.matmul %11, %14, %cst_7 {dimension_numbers = #tpu.dot_dimension_numbers<[1], [0], [0], [1], [0, 0, 1, 1], [], []>, precision = #tpu.contract_precision<fp32>} : vector<8x12xf32>, vector<12x32xf32>, vector<8x32xf32> -> vector<8x32xf32>
    %c0_8 = arith.constant 0 : index
    %c0_9 = arith.constant 0 : index
    %16 = vector.load %arg10[%c0_8, %c0_9] : memref<8x32xf32, #tpu.memory_space<vmem>>, vector<8x32xf32>
    tpu.vector_store %arg10[%c0_8, %c0_9], %13 {strides = array<i32>} : memref<8x32xf32, #tpu.memory_space<vmem>>, vector<8x32xf32>,
    %c0_10 = arith.constant 0 : index
    %c0_11 = arith.constant 0 : index
    %17 = vector.load %arg5[%c0_10, %c0_11] : memref<8x32xf32, #tpu.memory_space<vmem>>, vector<8x32xf32>
    %c0_12 = arith.constant 0 : index
    %c0_13 = arith.constant 0 : index
    %18 = vector.load %arg6[%c0_12, %c0_13] : memref<8x256xf32, #tpu.memory_space<vmem>>, vector<8x256xf32>
    %c0_14 = arith.constant 0 : index
    %c0_15 = arith.constant 0 : index
    %19 = vector.load %arg7[%c0_14, %c0_15] : memref<256x8xf32, #tpu.memory_space<vmem>>, vector<256x8xf32>
    %cst_16 = arith.constant dense<0.000000e+00> : vector<8x8xf32>
    %20 = tpu.matmul %13, %17, %cst_16 {dimension_numbers = #tpu.dot_dimension_numbers<[1], [1], [0], [0], [0, 0, 1, 0], [], []>, precision = #tpu.contract_precision<fp32>} : vector<8x32xf32>, vector<8x32xf32>, vector<8x8xf32> -> vector<8x8xf32>
    %cst_17 = arith.constant dense<0xFF800000> : vector<8xf32>
    %21 = vector.multi_reduction <maximumf>, %20, %cst_17 [1] : vector<8x8xf32> to vector<8xf32>
    %22 = vector.shape_cast %21 : vector<8xf32> to vector<8x1xf32>
    %23 = vector.broadcast %22 : vector<8x1xf32> to vector<8x8xf32>
    %24 = arith.subf %20, %23 : vector<8x8xf32>
    %25 = math.exp %24 : vector<8x8xf32>
    %cst_18 = arith.constant dense<0.000000e+00> : vector<8xf32>
    %26 = vector.multi_reduction <add>, %25, %cst_18 [1] : vector<8x8xf32> to vector<8xf32>
    %27 = vector.shape_cast %26 : vector<8xf32> to vector<8x1xf32>
    %28 = vector.broadcast %27 : vector<8x1xf32> to vector<8x8xf32>
    %29 = arith.divf %25, %28 : vector<8x8xf32>
    %cst_19 = arith.constant dense<0.000000e+00> : vector<8x256xf32>
    %30 = tpu.matmul %29, %18, %cst_19 {dimension_numbers = #tpu.dot_dimension_numbers<[1], [0], [0], [1], [0, 0, 1, 1], [], []>, precision = #tpu.contract_precision<fp32>} : vector<8x8xf32>, vector<8x256xf32>, vector<8x256xf32> -> vector<8x256xf32>
    %c0_20 = arith.constant 0 : index
    %c0_21 = arith.constant 0 : index
    %31 = vector.load %arg8[%c0_20, %c0_21] : memref<8x256xf32, #tpu.memory_space<vmem>>, vector<8x256xf32>
    tpu.vector_store %arg8[%c0_20, %c0_21], %30 {strides = array<i32>} : memref<8x256xf32, #tpu.memory_space<vmem>>, vector<8x256xf32>,
    %cst_22 = arith.constant 5.000000e-01 : f32
    %32 = vector.broadcast %cst_22 : f32 to vector<8x256xf32>
    %33 = arith.mulf %32, %30 : vector<8x256xf32>
    %34 = math.exp %33 : vector<8x256xf32>
    %35 = tpu.concatenate %15, %15, %15, %15, %15, %15, %15, %15 in 1 : vector<8x32xf32>, vector<8x32xf32>, vector<8x32xf32>, vector<8x32xf32>, vector<8x32xf32>, vector<8x32xf32>, vector<8x32xf32>, vector<8x32xf32> -> vector<8x256xf32>
    %36 = arith.mulf %34, %35 : vector<8x256xf32>
    %cst_23 = arith.constant dense<0.000000e+00> : vector<8x8xf32>
    %37 = tpu.matmul %36, %19, %cst_23 {dimension_numbers = #tpu.dot_dimension_numbers<[1], [0], [0], [1], [0, 0, 1, 1], [], []>} : vector<8x256xf32>, vector<256x8xf32>, vector<8x8xf32> -> vector<8x8xf32>
    %38 = arith.mulf %13, %15 : vector<8x32xf32>
    %cst_24 = arith.constant dense<0.000000e+00> : vector<8xf32>
    %39 = vector.multi_reduction <add>, %38, %cst_24 [1] : vector<8x32xf32> to vector<8xf32>
    %40 = vector.shape_cast %39 : vector<8xf32> to vector<8x1xf32>
    %41 = vector.broadcast %40 : vector<8x1xf32> to vector<8x8xf32>
    %42 = arith.addf %37, %41 : vector<8x8xf32>
    %cst_25 = arith.constant 0.000000e+00 : f32
    %43 = vector.broadcast %cst_25 : f32 to vector<8x8xf32>
    %44 = arith.maximumf %42, %43 : vector<8x8xf32>
    %45 = math.absf %42 : vector<8x8xf32>
    %cst_26 = arith.constant 0.000000e+00 : f32
    %46 = vector.broadcast %cst_26 : f32 to vector<8x8xf32>
    %47 = arith.subf %46, %45 : vector<8x8xf32>
    %48 = math.exp %47 : vector<8x8xf32>
    %cst_27 = arith.constant 1.000000e+00 : f32
    %49 = vector.broadcast %cst_27 : f32 to vector<8x8xf32>
    %50 = arith.addf %49, %48 : vector<8x8xf32>
    %51 = math.log %50 : vector<8x8xf32>
    %52 = arith.addf %44, %51 : vector<8x8xf32>
    %cst_28 = arith.constant 0.000000e+00 : f32
    %53 = vector.broadcast %cst_28 : f32 to vector<8x8xf32>
    %54 = arith.subf %53, %52 : vector<8x8xf32>
    %cst_29 = arith.constant -9.210340e+01 : f32
    %55 = vector.broadcast %cst_29 : f32 to vector<8x8xf32>
    %56 = arith.maximumf %54, %55 : vector<8x8xf32>
    %cst_30 = arith.constant dense<0.000000e+00> : vector<8xf32>
    %57 = vector.multi_reduction <add>, %56, %cst_30 [1] : vector<8x8xf32> to vector<8xf32>
    %58 = vector.shape_cast %57 : vector<8xf32> to vector<8x1xf32>
    %cst_31 = arith.constant -1.000000e+00 : f32
    %59 = vector.broadcast %cst_31 : f32 to vector<8x1xf32>
    %60 = arith.addf %59, %58 : vector<8x1xf32>
    %cst_32 = arith.constant -1.000000e+00 : f32
    %61 = vector.broadcast %cst_32 : f32 to vector<8x1xf32>
    %62 = arith.divf %61, %60 : vector<8x1xf32>
    %cst_33 = arith.constant 1.000000e+00 : f32
    %63 = vector.broadcast %cst_33 : f32 to vector<8x1xf32>
    %64 = arith.subf %63, %62 : vector<8x1xf32>
    %c0_34 = arith.constant 0 : index
    %c0_35 = arith.constant 0 : index
    %65 = vector.load %arg9[%c0_34, %c0_35] : memref<8x1xf32, #tpu.memory_space<vmem>>, vector<8x1xf32>
    tpu.vector_store %arg9[%c0_34, %c0_35], %64 {strides = array<i32>} : memref<8x1xf32, #tpu.memory_space<vmem>>, vector<8x1xf32>,
    return
  }
  func.func @transform_0(%arg0: i32) -> (i32, i32) {
    %c0_i32 = arith.constant 0 : i32
    %c0_i32_0 = arith.constant 0 : i32
    return %arg0, %c0_i32 : i32, i32
  }
  func.func @transform_1(%arg0: i32) -> (i32, i32) {
    %c0_i32 = arith.constant 0 : i32
    %c0_i32_0 = arith.constant 0 : i32
    return %arg0, %c0_i32 : i32, i32
  }
  func.func @transform_2(%arg0: i32) -> (i32, i32) {
    %c0_i32 = arith.constant 0 : i32
    %c0_i32_0 = arith.constant 0 : i32
    %c0_i32_1 = arith.constant 0 : i32
    return %c0_i32, %c0_i32_0 : i32, i32
  }
  func.func @transform_3(%arg0: i32) -> (i32, i32) {
    %c0_i32 = arith.constant 0 : i32
    %c0_i32_0 = arith.constant 0 : i32
    %c0_i32_1 = arith.constant 0 : i32
    return %c0_i32, %c0_i32_0 : i32, i32
  }
  func.func @transform_4(%arg0: i32) -> (i32, i32) {
    %c0_i32 = arith.constant 0 : i32
    %c0_i32_0 = arith.constant 0 : i32
    %c0_i32_1 = arith.constant 0 : i32
    return %c0_i32, %c0_i32_0 : i32, i32
  }
  func.func @transform_5(%arg0: i32) -> (i32, i32) {
    %c0_i32 = arith.constant 0 : i32
    %c0_i32_0 = arith.constant 0 : i32
    %c0_i32_1 = arith.constant 0 : i32
    return %c0_i32, %c0_i32_0 : i32, i32
  }
  func.func @transform_6(%arg0: i32) -> (i32, i32) {
    %c0_i32 = arith.constant 0 : i32
    %c0_i32_0 = arith.constant 0 : i32
    %c0_i32_1 = arith.constant 0 : i32
    return %c0_i32, %c0_i32_0 : i32, i32
  }
  func.func @transform_7(%arg0: i32) -> (i32, i32) {
    %c0_i32 = arith.constant 0 : i32
    %c0_i32_0 = arith.constant 0 : i32
    return %arg0, %c0_i32 : i32, i32
  }
  func.func @transform_8(%arg0: i32) -> (i32, i32) {
    %c0_i32 = arith.constant 0 : i32
    %c0_i32_0 = arith.constant 0 : i32
    return %arg0, %c0_i32 : i32, i32
  }
  func.func @transform_9(%arg0: i32) -> (i32, i32) {
    %c0_i32 = arith.constant 0 : i32
    %c0_i32_0 = arith.constant 0 : i32
    return %arg0, %c0_i32 : i32, i32
  }
}

</mosaic_0001>

<llo_original>
// kernel: tpu_custom_call.1
$region0: #{tpu_custom_call.1}
  #allocation0 [shape = 'u32[]', space=smem, size = 0x4, offset = 0x4, fixed_abs, tag = 'smem constant byte address 0x4 - core index']
  #allocation1 [shape = 'u32[144,128]{1,0:T(1,128)}', space=vmem, size = 0x12000, scoped, tag = 'internal scratch']
  %s0 = inlined_call_operand.vmem [shape: s32[8,1], index: 0, kind: input, shape index: {}]
  %s1 = inlined_call_operand.vmem [shape: s32[8,1], index: 1, kind: input, shape index: {}]
  %s2 = inlined_call_operand.vmem [shape: f32[16,32], index: 2, kind: input, shape index: {}]
  %s3 = inlined_call_operand.vmem [shape: f32[12,32], index: 3, kind: input, shape index: {}]
  %s4 = inlined_call_operand.vmem [shape: f32[8,32], index: 4, kind: input, shape index: {}]
  %s5 = inlined_call_operand.vmem [shape: f32[8,256], index: 5, kind: input, shape index: {}]
  %s6 = inlined_call_operand.vmem [shape: f32[256,8], index: 6, kind: input, shape index: {}]
  %s7 = inlined_call_operand.hbm [shape: f32[8,256], index: 7, kind: output, shape index: {0}]
  %s8 = inlined_call_operand.vmem [shape: f32[8,1], index: 8, kind: output, shape index: {1}]
  %s9 = inlined_call_operand.hbm [shape: f32[8,32], index: 9, kind: output, shape index: {2}]
  %10 = xla_tuple %s7, %s8, %s9
  %s11 = sld [smem:[#allocation0]]
  $region54: #{tpu_custom_call.1} parent=0
    _
  %s13 = ssub.s32 1, %s11
  %s14 = scalar_select 0, %s13, %s11
  $region1: #{tpu_custom_call.1} parent=0
    #allocation2 [shape = 'u8[8192]{0}', space=vmem, size = 0x2000, scoped, tag = 'output window, operand 0, single buffered']
    #allocation3 [shape = 's32[1]{0}', space=sflag, size = 0x4, scoped, tag = 'scoped memory for tpu_custom_call.1']
    #allocation4 [shape = 'u8[4096]{0}', space=vmem, size = 0x1000, scoped, tag = 'output window, operand 2, single buffered']
    #allocation5 [shape = 's32[1]{0}', space=sflag, size = 0x4, scoped, tag = 'scoped memory for tpu_custom_call.1']
    %15 = vsyncpa [#allocation3], 0
    %16 = vsyncpa [#allocation5], 0
    // Predicated region
    $region2: #{tpu_custom_call.1} parent=1 // pred_check
      _
    $region3: #{tpu_custom_call.1} parent=1 // pred_check_branch
      %18 = sbr.rel (0) target = $region5
    $region4: #{tpu_custom_call.1} parent=1 // pred_region
      _
    $region5: #{tpu_custom_call.1} parent=1 // pred_fallthru
      _
    // Predicated region
    $region6: #{tpu_custom_call.1} parent=1 // pred_check
      _
    $region7: #{tpu_custom_call.1} parent=1 // pred_check_branch
      %20 = sbr.rel (0) target = $region9
    $region8: #{tpu_custom_call.1} parent=1 // pred_region
      _
    $region9: #{tpu_custom_call.1} parent=1 // pred_fallthru
      _
    // Predicated region
    $region10: #{tpu_custom_call.1} parent=1 // pred_check
      _
    $region11: #{tpu_custom_call.1} parent=1 // pred_check_branch
      %22 = sbr.rel (0) target = $region13
    $region12: #{tpu_custom_call.1} parent=1 // pred_region
      _
    $region13: #{tpu_custom_call.1} parent=1 // pred_fallthru
      _
    // Predicated region
    $region14: #{tpu_custom_call.1} parent=1 // pred_check
      _
    $region15: #{tpu_custom_call.1} parent=1 // pred_check_branch
      %24 = sbr.rel (0) target = $region17
    $region16: #{tpu_custom_call.1} parent=1 // pred_region
      _
    $region17: #{tpu_custom_call.1} parent=1 // pred_fallthru
      _
    // Predicated region
    $region18: #{tpu_custom_call.1} parent=1 // pred_check
      _
    $region19: #{tpu_custom_call.1} parent=1 // pred_check_branch
      %26 = sbr.rel (0) target = $region21
    $region20: #{tpu_custom_call.1} parent=1 // pred_region
      _
    $region21: #{tpu_custom_call.1} parent=1 // pred_fallthru
      _
    // Predicated region
    $region22: #{tpu_custom_call.1} parent=1 // pred_check
      _
    $region23: #{tpu_custom_call.1} parent=1 // pred_check_branch
      %28 = sbr.rel (0) target = $region25
    $region24: #{tpu_custom_call.1} parent=1 // pred_region
      _
    $region25: #{tpu_custom_call.1} parent=1 // pred_fallthru
      _
    // Predicated region
    $region26: #{tpu_custom_call.1} parent=1 // pred_check
      _
    $region27: #{tpu_custom_call.1} parent=1 // pred_check_branch
      %30 = sbr.rel (0) target = $region29
    $region28: #{tpu_custom_call.1} parent=1 // pred_region
      _
    $region29: #{tpu_custom_call.1} parent=1 // pred_fallthru
      _
    %v31 = vld [vmem:[%s0] sm:$0xff]
    %v32 = vlaneseq
    %v33 = vand.u32 %v32, 127
    %34 = vset.pattern.permute.xlu0 0
    %35 = vperm.xlu0 %34, %v31
    %v36 = vpop.permute.xlu0 %35
    %vm37 = vcmp.eq.s32.totalorder %v36, %v33
    %v38 = vsel %vm37, 1, 0
    %v39 = vcvt.s32.f32 %v38
    %v40 = vld [vmem:[%s1] sm:$0xff]
    %41 = vset.pattern.permute.xlu0 0
    %42 = vperm.xlu0 %41, %v40
    %v43 = vpop.permute.xlu0 %42
    %vm44 = vcmp.eq.s32.totalorder %v43, %v33
    %v45 = vsel %vm44, 1, 0
    %v46 = vcvt.s32.f32 %v45
    %v47 = vld [vmem:[%s2] sm:$0xff]
    %v48 = vld [vmem:[%s2 + $0x8] sm:$0xff]
    %vm49 = vcmask 130048
    %v51 = vsel %vm49, %v39, 0
    %53 = vmatprep.subr.mxu0 0.0
    %v54 = vand.u32 %v47, 4294901760
    %55 = vmatpush1.msra.mxu0 %v54
    %56 = vmatprep.subr.mxu0 0.0
    %v57 = vand.u32 %v48, 4294901760
    %58 = vmatpush1.msra.mxu0 %v57
    %59 = vmatprep.subr.mxu0 0.0
    %60 = vmatpush1.msra.mxu0 0.0
    %61 = vmatprep.subr.mxu0 0.0
    %62 = vmatpush1.msra.mxu0 0.0
    %63 = vmatprep.subr.mxu0 0.0
    %64 = vmatpush1.msra.mxu0 0.0
    %65 = vmatprep.subr.mxu0 0.0
    %66 = vmatpush1.msra.mxu0 0.0
    %67 = vmatprep.subr.mxu0 0.0
    %68 = vmatpush1.msra.mxu0 0.0
    %69 = vmatprep.subr.mxu0 0.0
    %70 = vmatpush1.msra.mxu0 0.0
    %71 = vmatprep.subr.mxu0 0.0
    %72 = vmatpush1.msra.mxu0 0.0
    %73 = vmatprep.subr.mxu0 0.0
    %74 = vmatpush1.msra.mxu0 0.0
    %75 = vmatprep.subr.mxu0 0.0
    %76 = vmatpush1.msra.mxu0 0.0
    %77 = vmatprep.subr.mxu0 0.0
    %78 = vmatpush1.msra.mxu0 0.0
    %79 = vmatprep.subr.mxu0 0.0
    %80 = vmatpush1.msra.mxu0 0.0
    %81 = vmatprep.subr.mxu0 0.0
    %82 = vmatpush1.msra.mxu0 0.0
    %83 = vmatprep.subr.mxu0 0.0
    %84 = vmatpush1.msra.mxu0 0.0
    %85 = vmatprep.subr.mxu0 0.0
    %86 = vmatpush1.msra.mxu0 0.0
    %87 = vmatprep.subr.mxu0 0.0
    %88 = vmatpush1.msra.mxu0 0.0
    %89 = vmatprep.subr.mxu0 0.0
    %90 = vmatpush1.msra.mxu0 0.0
    %91 = vmatprep.subr.mxu0 0.0
    %92 = vmatpush1.msra.mxu0 0.0
    %93 = vmatprep.subr.mxu0 0.0
    %94 = vmatpush1.msra.mxu0 0.0
    %95 = vmatprep.subr.mxu0 0.0
    %96 = vmatpush1.msra.mxu0 0.0
    %97 = vmatprep.subr.mxu0 0.0
    %98 = vmatpush1.msra.mxu0 0.0
    %99 = vmatprep.subr.mxu0 0.0
    %100 = vmatpush1.msra.mxu0 0.0
    %101 = vmatprep.subr.mxu0 0.0
    %102 = vmatpush1.msra.mxu0 0.0
    %103 = vmatprep.subr.mxu0 0.0
    %104 = vmatpush1.msra.mxu0 0.0
    %105 = vmatprep.subr.mxu0 0.0
    %106 = vmatpush1.msra.mxu0 0.0
    %107 = vmatprep.subr.mxu0 0.0
    %108 = vmatpush1.msra.mxu0 0.0
    %109 = vmatprep.subr.mxu0 0.0
    %110 = vmatpush1.msra.mxu0 0.0
    %111 = vmatprep.subr.mxu0 0.0
    %112 = vmatpush1.msra.mxu0 0.0
    %113 = vmatprep.subr.mxu0 0.0
    %114 = vmatpush1.msra.mxu0 0.0
    %115 = vmatprep.subr.mxu0 0.0
    %116 = vmatpush1.msra.mxu0 0.0
    %117 = vmatprep.subr.mxu0 0.0
    %118 = vmatpush1.msra.mxu0 0.0
    %119 = vmatprep.mubr.f32.mxu0 0.0
    %v120 = vand.u32 %v51, 4294901760
    %v121 = vsub.f32 %v51, %v120
    %v122 = vand.u32 %v121, 4294901760
    %v123 = vsub.f32 %v121, %v122
    %v124 = vand.u32 %v123, 4294901760
    %125 = vmatmul.mubr.f32.gmra.mrb[0].mxu0 %v124
    %v126 = vpop.f32.mrb[0].mxu0
    %v127 = vadd.f32 0.0, %v126
    %v128 = vpop.f32.mrb[0].mxu0
    %129 = vdwg.mxu0
    %130 = vmatprep.subr.mxu0 0.0
    %v131 = vand.u32 %v47, 4294901760
    %v132 = vsub.f32 %v47, %v131
    %v133 = vand.u32 %v132, 4294901760
    %v134 = vsub.f32 %v132, %v133
    %v135 = vand.u32 %v134, 4294901760
    %136 = vmatpush1.msra.mxu0 %v135
    %137 = vmatprep.subr.mxu0 0.0
    %v138 = vand.u32 %v48, 4294901760
    %v139 = vsub.f32 %v48, %v138
    %v140 = vand.u32 %v139, 4294901760
    %v141 = vsub.f32 %v139, %v140
    %v142 = vand.u32 %v141, 4294901760
    %143 = vmatpush1.msra.mxu0 %v142
    %144 = vmatprep.subr.mxu0 0.0
    %145 = vmatpush1.msra.mxu0 0.0
    %146 = vmatprep.subr.mxu0 0.0
    %147 = vmatpush1.msra.mxu0 0.0
    %148 = vmatprep.subr.mxu0 0.0
    %149 = vmatpush1.msra.mxu0 0.0
    %150 = vmatprep.subr.mxu0 0.0
    %151 = vmatpush1.msra.mxu0 0.0
    %152 = vmatprep.subr.mxu0 0.0
    %153 = vmatpush1.msra.mxu0 0.0
    %154 = vmatprep.subr.mxu0 0.0
    %155 = vmatpush1.msra.mxu0 0.0
    %156 = vmatprep.subr.mxu0 0.0
    %157 = vmatpush1.msra.mxu0 0.0
    %158 = vmatprep.subr.mxu0 0.0
    %159 = vmatpush1.msra.mxu0 0.0
    %160 = vmatprep.subr.mxu0 0.0
    %161 = vmatpush1.msra.mxu0 0.0
    %162 = vmatprep.subr.mxu0 0.0
    %163 = vmatpush1.msra.mxu0 0.0
    %164 = vmatprep.subr.mxu0 0.0
    %165 = vmatpush1.msra.mxu0 0.0
    %166 = vmatprep.subr.mxu0 0.0
    %167 = vmatpush1.msra.mxu0 0.0
    %168 = vmatprep.subr.mxu0 0.0
    %169 = vmatpush1.msra.mxu0 0.0
    %170 = vmatprep.subr.mxu0 0.0
    %171 = vmatpush1.msra.mxu0 0.0
    %172 = vmatprep.subr.mxu0 0.0
    %173 = vmatpush1.msra.mxu0 0.0
    %174 = vmatprep.subr.mxu0 0.0
    %175 = vmatpush1.msra.mxu0 0.0
    %176 = vmatprep.subr.mxu0 0.0
    %177 = vmatpush1.msra.mxu0 0.0
    %178 = vmatprep.subr.mxu0 0.0
    %179 = vmatpush1.msra.mxu0 0.0
    %180 = vmatprep.subr.mxu0 0.0
    %181 = vmatpush1.msra.mxu0 0.0
    %182 = vmatprep.subr.mxu0 0.0
    %183 = vmatpush1.msra.mxu0 0.0
    %184 = vmatprep.subr.mxu0 0.0
    %185 = vmatpush1.msra.mxu0 0.0
    %186 = vmatprep.subr.mxu0 0.0
    %187 = vmatpush1.msra.mxu0 0.0
    %188 = vmatprep.subr.mxu0 0.0
    %189 = vmatpush1.msra.mxu0 0.0
    %190 = vmatprep.subr.mxu0 0.0
    %191 = vmatpush1.msra.mxu0 0.0
    %192 = vmatprep.subr.mxu0 0.0
    %193 = vmatpush1.msra.mxu0 0.0
    %194 = vmatprep.subr.mxu0 0.0
    %195 = vmatpush1.msra.mxu0 0.0
    %196 = vmatprep.subr.mxu0 0.0
    %197 = vmatpush1.msra.mxu0 0.0
    %198 = vmatprep.subr.mxu0 0.0
    %199 = vmatpush1.msra.mxu0 0.0
    %200 = vmatprep.subr.mxu0 0.0
    %201 = vmatpush1.msra.mxu0 0.0
    %202 = vmatprep.subr.mxu0 0.0
    %203 = vmatpush1.msra.mxu0 0.0
    %204 = vmatprep.mubr.f32.mxu0 0.0
    %v205 = vand.u32 %v51, 4294901760
    %206 = vmatmul.mubr.f32.gmra.mrb[0].mxu0 %v205
    %v207 = vpop.f32.mrb[0].mxu0
    %v208 = vadd.f32 %v127, %v207
    %v209 = vpop.f32.mrb[0].mxu0
    %210 = vdwg.mxu0
    %211 = vmatprep.subr.mxu0 0.0
    %v212 = vand.u32 %v47, 4294901760
    %v213 = vsub.f32 %v47, %v212
    %214 = vmatpush1.msra.mxu0 %v213
    %215 = vmatprep.subr.mxu0 0.0
    %v216 = vand.u32 %v48, 4294901760
    %v217 = vsub.f32 %v48, %v216
    %218 = vmatpush1.msra.mxu0 %v217
    %219 = vmatprep.subr.mxu0 0.0
    %220 = vmatpush1.msra.mxu0 0.0
    %221 = vmatprep.subr.mxu0 0.0
    %222 = vmatpush1.msra.mxu0 0.0
    %223 = vmatprep.subr.mxu0 0.0
    %224 = vmatpush1.msra.mxu0 0.0
    %225 = vmatprep.subr.mxu0 0.0
    %226 = vmatpush1.msra.mxu0 0.0
    %227 = vmatprep.subr.mxu0 0.0
    %228 = vmatpush1.msra.mxu0 0.0
    %229 = vmatprep.subr.mxu0 0.0
    %230 = vmatpush1.msra.mxu0 0.0
    %231 = vmatprep.subr.mxu0 0.0
    %232 = vmatpush1.msra.mxu0 0.0
    %233 = vmatprep.subr.mxu0 0.0
    %234 = vmatpush1.msra.mxu0 0.0
    %235 = vmatprep.subr.mxu0 0.0
    %236 = vmatpush1.msra.mxu0 0.0
    %237 = vmatprep.subr.mxu0 0.0
    %238 = vmatpush1.msra.mxu0 0.0
    %239 = vmatprep.subr.mxu0 0.0
    %240 = vmatpush1.msra.mxu0 0.0
    %241 = vmatprep.subr.mxu0 0.0
    %242 = vmatpush1.msra.mxu0 0.0
    %243 = vmatprep.subr.mxu0 0.0
    %244 = vmatpush1.msra.mxu0 0.0
    %245 = vmatprep.subr.mxu0 0.0
    %246 = vmatpush1.msra.mxu0 0.0
    %247 = vmatprep.subr.mxu0 0.0
    %248 = vmatpush1.msra.mxu0 0.0
    %249 = vmatprep.subr.mxu0 0.0
    %250 = vmatpush1.msra.mxu0 0.0
    %251 = vmatprep.subr.mxu0 0.0
    %252 = vmatpush1.msra.mxu0 0.0
    %253 = vmatprep.subr.mxu0 0.0
    %254 = vmatpush1.msra.mxu0 0.0
    %255 = vmatprep.subr.mxu0 0.0
    %256 = vmatpush1.msra.mxu0 0.0
    %257 = vmatprep.subr.mxu0 0.0
    %258 = vmatpush1.msra.mxu0 0.0
    %259 = vmatprep.subr.mxu0 0.0
    %260 = vmatpush1.msra.mxu0 0.0
    %261 = vmatprep.subr.mxu0 0.0
    %262 = vmatpush1.msra.mxu0 0.0
    %263 = vmatprep.subr.mxu0 0.0
    %264 = vmatpush1.msra.mxu0 0.0
    %265 = vmatprep.subr.mxu0 0.0
    %266 = vmatpush1.msra.mxu0 0.0
    %267 = vmatprep.subr.mxu0 0.0
    %268 = vmatpush1.msra.mxu0 0.0
    %269 = vmatprep.subr.mxu0 0.0
    %270 = vmatpush1.msra.mxu0 0.0
    %271 = vmatprep.subr.mxu0 0.0
    %272 = vmatpush1.msra.mxu0 0.0
    %273 = vmatprep.subr.mxu0 0.0
    %274 = vmatpush1.msra.mxu0 0.0
    %275 = vmatprep.subr.mxu0 0.0
    %276 = vmatpush1.msra.mxu0 0.0
    %277 = vmatprep.subr.mxu0 0.0
    %278 = vmatpush1.msra.mxu0 0.0
    %279 = vmatprep.mubr.f32.mxu0 0.0
    %v280 = vand.u32 %v51, 4294901760
    %v281 = vsub.f32 %v51, %v280
    %282 = vmatmul.mubr.f32.gmra.mrb[0].mxu0 %v281
    %v283 = vpop.f32.mrb[0].mxu0
    %v284 = vadd.f32 %v208, %v283
    %v285 = vpop.f32.mrb[0].mxu0
    %286 = vdwg.mxu0
    %287 = vmatprep.subr.mxu0 0.0
    %v288 = vand.u32 %v47, 4294901760
    %289 = vmatpush1.msra.mxu0 %v288
    %290 = vmatprep.subr.mxu0 0.0
    %v291 = vand.u32 %v48, 4294901760
    %292 = vmatpush1.msra.mxu0 %v291
    %293 = vmatprep.subr.mxu0 0.0
    %294 = vmatpush1.msra.mxu0 0.0
    %295 = vmatprep.subr.mxu0 0.0
    %296 = vmatpush1.msra.mxu0 0.0
    %297 = vmatprep.subr.mxu0 0.0
    %298 = vmatpush1.msra.mxu0 0.0
    %299 = vmatprep.subr.mxu0 0.0
    %300 = vmatpush1.msra.mxu0 0.0
    %301 = vmatprep.subr.mxu0 0.0
    %302 = vmatpush1.msra.mxu0 0.0
    %303 = vmatprep.subr.mxu0 0.0
    %304 = vmatpush1.msra.mxu0 0.0
    %305 = vmatprep.subr.mxu0 0.0
    %306 = vmatpush1.msra.mxu0 0.0
    %307 = vmatprep.subr.mxu0 0.0
    %308 = vmatpush1.msra.mxu0 0.0
    %309 = vmatprep.subr.mxu0 0.0
    %310 = vmatpush1.msra.mxu0 0.0
    %311 = vmatprep.subr.mxu0 0.0
    %312 = vmatpush1.msra.mxu0 0.0
    %313 = vmatprep.subr.mxu0 0.0
    %314 = vmatpush1.msra.mxu0 0.0
    %315 = vmatprep.subr.mxu0 0.0
    %316 = vmatpush1.msra.mxu0 0.0
    %317 = vmatprep.subr.mxu0 0.0
    %318 = vmatpush1.msra.mxu0 0.0
    %319 = vmatprep.subr.mxu0 0.0
    %320 = vmatpush1.msra.mxu0 0.0
    %321 = vmatprep.subr.mxu0 0.0
    %322 = vmatpush1.msra.mxu0 0.0
    %323 = vmatprep.subr.mxu0 0.0
    %324 = vmatpush1.msra.mxu0 0.0
    %325 = vmatprep.subr.mxu0 0.0
    %326 = vmatpush1.msra.mxu0 0.0
    %327 = vmatprep.subr.mxu0 0.0
    %328 = vmatpush1.msra.mxu0 0.0
    %329 = vmatprep.subr.mxu0 0.0
    %330 = vmatpush1.msra.mxu0 0.0
    %331 = vmatprep.subr.mxu0 0.0
    %332 = vmatpush1.msra.mxu0 0.0
    %333 = vmatprep.subr.mxu0 0.0
    %334 = vmatpush1.msra.mxu0 0.0
    %335 = vmatprep.subr.mxu0 0.0
    %336 = vmatpush1.msra.mxu0 0.0
    %337 = vmatprep.subr.mxu0 0.0
    %338 = vmatpush1.msra.mxu0 0.0
    %339 = vmatprep.subr.mxu0 0.0
    %340 = vmatpush1.msra.mxu0 0.0
    %341 = vmatprep.subr.mxu0 0.0
    %342 = vmatpush1.msra.mxu0 0.0
    %343 = vmatprep.subr.mxu0 0.0
    %344 = vmatpush1.msra.mxu0 0.0
    %345 = vmatprep.subr.mxu0 0.0
    %346 = vmatpush1.msra.mxu0 0.0
    %347 = vmatprep.subr.mxu0 0.0
    %348 = vmatpush1.msra.mxu0 0.0
    %349 = vmatprep.subr.mxu0 0.0
    %350 = vmatpush1.msra.mxu0 0.0
    %351 = vmatprep.subr.mxu0 0.0
    %352 = vmatpush1.msra.mxu0 0.0
    %353 = vmatprep.mubr.f32.mxu0 0.0
    %v354 = vand.u32 %v51, 4294901760
    %v355 = vsub.f32 %v51, %v354
    %v356 = vand.u32 %v355, 4294901760
    %357 = vmatmul.mubr.f32.gmra.mrb[0].mxu0 %v356
    %v358 = vpop.f32.mrb[0].mxu0
    %v359 = vadd.f32 %v284, %v358
    %v360 = vpop.f32.mrb[0].mxu0
    %361 = vdwg.mxu0
    %362 = vmatprep.subr.mxu0 0.0
    %v363 = vand.u32 %v47, 4294901760
    %v364 = vsub.f32 %v47, %v363
    %v365 = vand.u32 %v364, 4294901760
    %366 = vmatpush1.msra.mxu0 %v365
    %367 = vmatprep.subr.mxu0 0.0
    %v368 = vand.u32 %v48, 4294901760
    %v369 = vsub.f32 %v48, %v368
    %v370 = vand.u32 %v369, 4294901760
    %371 = vmatpush1.msra.mxu0 %v370
    %372 = vmatprep.subr.mxu0 0.0
    %373 = vmatpush1.msra.mxu0 0.0
    %374 = vmatprep.subr.mxu0 0.0
    %375 = vmatpush1.msra.mxu0 0.0
    %376 = vmatprep.subr.mxu0 0.0
    %377 = vmatpush1.msra.mxu0 0.0
    %378 = vmatprep.subr.mxu0 0.0
    %379 = vmatpush1.msra.mxu0 0.0
    %380 = vmatprep.subr.mxu0 0.0
    %381 = vmatpush1.msra.mxu0 0.0
    %382 = vmatprep.subr.mxu0 0.0
    %383 = vmatpush1.msra.mxu0 0.0
    %384 = vmatprep.subr.mxu0 0.0
    %385 = vmatpush1.msra.mxu0 0.0
    %386 = vmatprep.subr.mxu0 0.0
    %387 = vmatpush1.msra.mxu0 0.0
    %388 = vmatprep.subr.mxu0 0.0
    %389 = vmatpush1.msra.mxu0 0.0
    %390 = vmatprep.subr.mxu0 0.0
    %391 = vmatpush1.msra.mxu0 0.0
    %392 = vmatprep.subr.mxu0 0.0
    %393 = vmatpush1.msra.mxu0 0.0
    %394 = vmatprep.subr.mxu0 0.0
    %395 = vmatpush1.msra.mxu0 0.0
    %396 = vmatprep.subr.mxu0 0.0
    %397 = vmatpush1.msra.mxu0 0.0
    %398 = vmatprep.subr.mxu0 0.0
    %399 = vmatpush1.msra.mxu0 0.0
    %400 = vmatprep.subr.mxu0 0.0
    %401 = vmatpush1.msra.mxu0 0.0
    %402 = vmatprep.subr.mxu0 0.0
    %403 = vmatpush1.msra.mxu0 0.0
    %404 = vmatprep.subr.mxu0 0.0
    %405 = vmatpush1.msra.mxu0 0.0
    %406 = vmatprep.subr.mxu0 0.0
    %407 = vmatpush1.msra.mxu0 0.0
    %408 = vmatprep.subr.mxu0 0.0
    %409 = vmatpush1.msra.mxu0 0.0
    %410 = vmatprep.subr.mxu0 0.0
    %411 = vmatpush1.msra.mxu0 0.0
    %412 = vmatprep.subr.mxu0 0.0
    %413 = vmatpush1.msra.mxu0 0.0
    %414 = vmatprep.subr.mxu0 0.0
    %415 = vmatpush1.msra.mxu0 0.0
    %416 = vmatprep.subr.mxu0 0.0
    %417 = vmatpush1.msra.mxu0 0.0
    %418 = vmatprep.subr.mxu0 0.0
    %419 = vmatpush1.msra.mxu0 0.0
    %420 = vmatprep.subr.mxu0 0.0
    %421 = vmatpush1.msra.mxu0 0.0
    %422 = vmatprep.subr.mxu0 0.0
    %423 = vmatpush1.msra.mxu0 0.0
    %424 = vmatprep.subr.mxu0 0.0
    %425 = vmatpush1.msra.mxu0 0.0
    %426 = vmatprep.subr.mxu0 0.0
    %427 = vmatpush1.msra.mxu0 0.0
    %428 = vmatprep.subr.mxu0 0.0
    %429 = vmatpush1.msra.mxu0 0.0
    %430 = vmatprep.subr.mxu0 0.0
    %431 = vmatpush1.msra.mxu0 0.0
    %432 = vmatprep.mubr.f32.mxu0 0.0
    %v433 = vand.u32 %v51, 4294901760
    %434 = vmatmul.mubr.f32.gmra.mrb[0].mxu0 %v433
    %v435 = vpop.f32.mrb[0].mxu0
    %v436 = vadd.f32 %v359, %v435
    %v437 = vpop.f32.mrb[0].mxu0
    %438 = vdwg.mxu0
    %439 = vmatprep.subr.mxu0 0.0
    %v440 = vand.u32 %v47, 4294901760
    %441 = vmatpush1.msra.mxu0 %v440
    %442 = vmatprep.subr.mxu0 0.0
    %v443 = vand.u32 %v48, 4294901760
    %444 = vmatpush1.msra.mxu0 %v443
    %445 = vmatprep.subr.mxu0 0.0
    %446 = vmatpush1.msra.mxu0 0.0
    %447 = vmatprep.subr.mxu0 0.0
    %448 = vmatpush1.msra.mxu0 0.0
    %449 = vmatprep.subr.mxu0 0.0
    %450 = vmatpush1.msra.mxu0 0.0
    %451 = vmatprep.subr.mxu0 0.0
    %452 = vmatpush1.msra.mxu0 0.0
    %453 = vmatprep.subr.mxu0 0.0
    %454 = vmatpush1.msra.mxu0 0.0
    %455 = vmatprep.subr.mxu0 0.0
    %456 = vmatpush1.msra.mxu0 0.0
    %457 = vmatprep.subr.mxu0 0.0
    %458 = vmatpush1.msra.mxu0 0.0
    %459 = vmatprep.subr.mxu0 0.0
    %460 = vmatpush1.msra.mxu0 0.0
    %461 = vmatprep.subr.mxu0 0.0
    %462 = vmatpush1.msra.mxu0 0.0
    %463 = vmatprep.subr.mxu0 0.0
    %464 = vmatpush1.msra.mxu0 0.0
    %465 = vmatprep.subr.mxu0 0.0
    %466 = vmatpush1.msra.mxu0 0.0
    %467 = vmatprep.subr.mxu0 0.0
    %468 = vmatpush1.msra.mxu0 0.0
    %469 = vmatprep.subr.mxu0 0.0
    %470 = vmatpush1.msra.mxu0 0.0
    %471 = vmatprep.subr.mxu0 0.0
    %472 = vmatpush1.msra.mxu0 0.0
    %473 = vmatprep.subr.mxu0 0.0
    %474 = vmatpush1.msra.mxu0 0.0
    %475 = vmatprep.subr.mxu0 0.0
    %476 = vmatpush1.msra.mxu0 0.0
    %477 = vmatprep.subr.mxu0 0.0
    %478 = vmatpush1.msra.mxu0 0.0
    %479 = vmatprep.subr.mxu0 0.0
    %480 = vmatpush1.msra.mxu0 0.0
    %481 = vmatprep.subr.mxu0 0.0
    %482 = vmatpush1.msra.mxu0 0.0
    %483 = vmatprep.subr.mxu0 0.0
    %484 = vmatpush1.msra.mxu0 0.0
    %485 = vmatprep.subr.mxu0 0.0
    %486 = vmatpush1.msra.mxu0 0.0
    %487 = vmatprep.subr.mxu0 0.0
    %488 = vmatpush1.msra.mxu0 0.0
    %489 = vmatprep.subr.mxu0 0.0
    %490 = vmatpush1.msra.mxu0 0.0
    %491 = vmatprep.subr.mxu0 0.0
    %492 = vmatpush1.msra.mxu0 0.0
    %493 = vmatprep.subr.mxu0 0.0
    %494 = vmatpush1.msra.mxu0 0.0
    %495 = vmatprep.subr.mxu0 0.0
    %496 = vmatpush1.msra.mxu0 0.0
    %497 = vmatprep.subr.mxu0 0.0
    %498 = vmatpush1.msra.mxu0 0.0
    %499 = vmatprep.subr.mxu0 0.0
    %500 = vmatpush1.msra.mxu0 0.0
    %501 = vmatprep.subr.mxu0 0.0
    %502 = vmatpush1.msra.mxu0 0.0
    %503 = vmatprep.subr.mxu0 0.0
    %504 = vmatpush1.msra.mxu0 0.0
    %505 = vmatprep.mubr.f32.mxu0 0.0
    %v506 = vand.u32 %v51, 4294901760
    %507 = vmatmul.mubr.f32.gmra.mrb[0].mxu0 %v506
    %v508 = vpop.f32.mrb[0].mxu0
    %v509 = vadd.f32 %v436, %v508
    %v510 = vpop.f32.mrb[0].mxu0
    %511 = vdwg.mxu0
    %v512 = vld [vmem:[%s3] sm:$0xff]
    %v513 = vld [vmem:[%s3 + $0x8] sm:$0xf]
    %vm514 = vcmask 97280
    %v516 = vsel %vm514, %v46, 0
    %vm518 = vcmask 1043456
    %v520 = vsel %vm518, %v513, 0
    %522 = vmatprep.subr.mxu0 0.0
    %v523 = vand.u32 %v512, 4294901760
    %524 = vmatpush1.msra.mxu0 %v523
    %525 = vmatprep.subr.mxu0 0.0
    %v526 = vand.u32 %v520, 4294901760
    %527 = vmatpush1.msra.mxu0 %v526
    %528 = vmatprep.subr.mxu0 0.0
    %529 = vmatpush1.msra.mxu0 0.0
    %530 = vmatprep.subr.mxu0 0.0
    %531 = vmatpush1.msra.mxu0 0.0
    %532 = vmatprep.subr.mxu0 0.0
    %533 = vmatpush1.msra.mxu0 0.0
    %534 = vmatprep.subr.mxu0 0.0
    %535 = vmatpush1.msra.mxu0 0.0
    %536 = vmatprep.subr.mxu0 0.0
    %537 = vmatpush1.msra.mxu0 0.0
    %538 = vmatprep.subr.mxu0 0.0
    %539 = vmatpush1.msra.mxu0 0.0
    %540 = vmatprep.subr.mxu0 0.0
    %541 = vmatpush1.msra.mxu0 0.0
    %542 = vmatprep.subr.mxu0 0.0
    %543 = vmatpush1.msra.mxu0 0.0
    %544 = vmatprep.subr.mxu0 0.0
    %545 = vmatpush1.msra.mxu0 0.0
    %546 = vmatprep.subr.mxu0 0.0
    %547 = vmatpush1.msra.mxu0 0.0
    %548 = vmatprep.subr.mxu0 0.0
    %549 = vmatpush1.msra.mxu0 0.0
    %550 = vmatprep.subr.mxu0 0.0
    %551 = vmatpush1.msra.mxu0 0.0
    %552 = vmatprep.subr.mxu0 0.0
    %553 = vmatpush1.msra.mxu0 0.0
    %554 = vmatprep.subr.mxu0 0.0
    %555 = vmatpush1.msra.mxu0 0.0
    %556 = vmatprep.subr.mxu0 0.0
    %557 = vmatpush1.msra.mxu0 0.0
    %558 = vmatprep.subr.mxu0 0.0
    %559 = vmatpush1.msra.mxu0 0.0
    %560 = vmatprep.subr.mxu0 0.0
    %561 = vmatpush1.msra.mxu0 0.0
    %562 = vmatprep.subr.mxu0 0.0
    %563 = vmatpush1.msra.mxu0 0.0
    %564 = vmatprep.subr.mxu0 0.0
    %565 = vmatpush1.msra.mxu0 0.0
    %566 = vmatprep.subr.mxu0 0.0
    %567 = vmatpush1.msra.mxu0 0.0
    %568 = vmatprep.subr.mxu0 0.0
    %569 = vmatpush1.msra.mxu0 0.0
    %570 = vmatprep.subr.mxu0 0.0
    %571 = vmatpush1.msra.mxu0 0.0
    %572 = vmatprep.subr.mxu0 0.0
    %573 = vmatpush1.msra.mxu0 0.0
    %574 = vmatprep.subr.mxu0 0.0
    %575 = vmatpush1.msra.mxu0 0.0
    %576 = vmatprep.subr.mxu0 0.0
    %577 = vmatpush1.msra.mxu0 0.0
    %578 = vmatprep.subr.mxu0 0.0
    %579 = vmatpush1.msra.mxu0 0.0
    %580 = vmatprep.subr.mxu0 0.0
    %581 = vmatpush1.msra.mxu0 0.0
    %582 = vmatprep.subr.mxu0 0.0
    %583 = vmatpush1.msra.mxu0 0.0
    %584 = vmatprep.subr.mxu0 0.0
    %585 = vmatpush1.msra.mxu0 0.0
    %586 = vmatprep.subr.mxu0 0.0
    %587 = vmatpush1.msra.mxu0 0.0
    %588 = vmatprep.mubr.f32.mxu0 0.0
    %v589 = vand.u32 %v516, 4294901760
    %v590 = vsub.f32 %v516, %v589
    %v591 = vand.u32 %v590, 4294901760
    %v592 = vsub.f32 %v590, %v591
    %v593 = vand.u32 %v592, 4294901760
    %594 = vmatmul.mubr.f32.gmra.mrb[0].mxu0 %v593
    %v595 = vpop.f32.mrb[0].mxu0
    %v596 = vadd.f32 0.0, %v595
    %v597 = vpop.f32.mrb[0].mxu0
    %598 = vdwg.mxu0
    %599 = vmatprep.subr.mxu0 0.0
    %v600 = vand.u32 %v512, 4294901760
    %v601 = vsub.f32 %v512, %v600
    %v602 = vand.u32 %v601, 4294901760
    %v603 = vsub.f32 %v601, %v602
    %v604 = vand.u32 %v603, 4294901760
    %605 = vmatpush1.msra.mxu0 %v604
    %606 = vmatprep.subr.mxu0 0.0
    %v607 = vand.u32 %v520, 4294901760
    %v608 = vsub.f32 %v520, %v607
    %v609 = vand.u32 %v608, 4294901760
    %v610 = vsub.f32 %v608, %v609
    %v611 = vand.u32 %v610, 4294901760
    %612 = vmatpush1.msra.mxu0 %v611
    %613 = vmatprep.subr.mxu0 0.0
    %614 = vmatpush1.msra.mxu0 0.0
    %615 = vmatprep.subr.mxu0 0.0
    %616 = vmatpush1.msra.mxu0 0.0
    %617 = vmatprep.subr.mxu0 0.0
    %618 = vmatpush1.msra.mxu0 0.0
    %619 = vmatprep.subr.mxu0 0.0
    %620 = vmatpush1.msra.mxu0 0.0
    %621 = vmatprep.subr.mxu0 0.0
    %622 = vmatpush1.msra.mxu0 0.0
    %623 = vmatprep.subr.mxu0 0.0
    %624 = vmatpush1.msra.mxu0 0.0
    %625 = vmatprep.subr.mxu0 0.0
    %626 = vmatpush1.msra.mxu0 0.0
    %627 = vmatprep.subr.mxu0 0.0
    %628 = vmatpush1.msra.mxu0 0.0
    %629 = vmatprep.subr.mxu0 0.0
    %630 = vmatpush1.msra.mxu0 0.0
    %631 = vmatprep.subr.mxu0 0.0
    %632 = vmatpush1.msra.mxu0 0.0
    %633 = vmatprep.subr.mxu0 0.0
    %634 = vmatpush1.msra.mxu0 0.0
    %635 = vmatprep.subr.mxu0 0.0
    %636 = vmatpush1.msra.mxu0 0.0
    %637 = vmatprep.subr.mxu0 0.0
    %638 = vmatpush1.msra.mxu0 0.0
    %639 = vmatprep.subr.mxu0 0.0
    %640 = vmatpush1.msra.mxu0 0.0
    %641 = vmatprep.subr.mxu0 0.0
    %642 = vmatpush1.msra.mxu0 0.0
    %643 = vmatprep.subr.mxu0 0.0
    %644 = vmatpush1.msra.mxu0 0.0
    %645 = vmatprep.subr.mxu0 0.0
    %646 = vmatpush1.msra.mxu0 0.0
    %647 = vmatprep.subr.mxu0 0.0
    %648 = vmatpush1.msra.mxu0 0.0
    %649 = vmatprep.subr.mxu0 0.0
    %650 = vmatpush1.msra.mxu0 0.0
    %651 = vmatprep.subr.mxu0 0.0
    %652 = vmatpush1.msra.mxu0 0.0
    %653 = vmatprep.subr.mxu0 0.0
    %654 = vmatpush1.msra.mxu0 0.0
    %655 = vmatprep.subr.mxu0 0.0
    %656 = vmatpush1.msra.mxu0 0.0
    %657 = vmatprep.subr.mxu0 0.0
    %658 = vmatpush1.msra.mxu0 0.0
    %659 = vmatprep.subr.mxu0 0.0
    %660 = vmatpush1.msra.mxu0 0.0
    %661 = vmatprep.subr.mxu0 0.0
    %662 = vmatpush1.msra.mxu0 0.0
    %663 = vmatprep.subr.mxu0 0.0
    %664 = vmatpush1.msra.mxu0 0.0
    %665 = vmatprep.subr.mxu0 0.0
    %666 = vmatpush1.msra.mxu0 0.0
    %667 = vmatprep.subr.mxu0 0.0
    %668 = vmatpush1.msra.mxu0 0.0
    %669 = vmatprep.subr.mxu0 0.0
    %670 = vmatpush1.msra.mxu0 0.0
    %671 = vmatprep.subr.mxu0 0.0
    %672 = vmatpush1.msra.mxu0 0.0
    %673 = vmatprep.mubr.f32.mxu0 0.0
    %v674 = vand.u32 %v516, 4294901760
    %675 = vmatmul.mubr.f32.gmra.mrb[0].mxu0 %v674
    %v676 = vpop.f32.mrb[0].mxu0
    %v677 = vadd.f32 %v596, %v676
    %v678 = vpop.f32.mrb[0].mxu0
    %679 = vdwg.mxu0
    %680 = vmatprep.subr.mxu0 0.0
    %v681 = vand.u32 %v512, 4294901760
    %v682 = vsub.f32 %v512, %v681
    %683 = vmatpush1.msra.mxu0 %v682
    %684 = vmatprep.subr.mxu0 0.0
    %v685 = vand.u32 %v520, 4294901760
    %v686 = vsub.f32 %v520, %v685
    %687 = vmatpush1.msra.mxu0 %v686
    %688 = vmatprep.subr.mxu0 0.0
    %689 = vmatpush1.msra.mxu0 0.0
    %690 = vmatprep.subr.mxu0 0.0
    %691 = vmatpush1.msra.mxu0 0.0
    %692 = vmatprep.subr.mxu0 0.0
    %693 = vmatpush1.msra.mxu0 0.0
    %694 = vmatprep.subr.mxu0 0.0
    %695 = vmatpush1.msra.mxu0 0.0
    %696 = vmatprep.subr.mxu0 0.0
    %697 = vmatpush1.msra.mxu0 0.0
    %698 = vmatprep.subr.mxu0 0.0
    %699 = vmatpush1.msra.mxu0 0.0
    %700 = vmatprep.subr.mxu0 0.0
    %701 = vmatpush1.msra.mxu0 0.0
    %702 = vmatprep.subr.mxu0 0.0
    %703 = vmatpush1.msra.mxu0 0.0
    %704 = vmatprep.subr.mxu0 0.0
    %705 = vmatpush1.msra.mxu0 0.0
    %706 = vmatprep.subr.mxu0 0.0
    %707 = vmatpush1.msra.mxu0 0.0
    %708 = vmatprep.subr.mxu0 0.0
    %709 = vmatpush1.msra.mxu0 0.0
    %710 = vmatprep.subr.mxu0 0.0
    %711 = vmatpush1.msra.mxu0 0.0
    %712 = vmatprep.subr.mxu0 0.0
    %713 = vmatpush1.msra.mxu0 0.0
    %714 = vmatprep.subr.mxu0 0.0
    %715 = vmatpush1.msra.mxu0 0.0
    %716 = vmatprep.subr.mxu0 0.0
    %717 = vmatpush1.msra.mxu0 0.0
    %718 = vmatprep.subr.mxu0 0.0
    %719 = vmatpush1.msra.mxu0 0.0
    %720 = vmatprep.subr.mxu0 0.0
    %721 = vmatpush1.msra.mxu0 0.0
    %722 = vmatprep.subr.mxu0 0.0
    %723 = vmatpush1.msra.mxu0 0.0
    %724 = vmatprep.subr.mxu0 0.0
    %725 = vmatpush1.msra.mxu0 0.0
    %726 = vmatprep.subr.mxu0 0.0
    %727 = vmatpush1.msra.mxu0 0.0
    %728 = vmatprep.subr.mxu0 0.0
    %729 = vmatpush1.msra.mxu0 0.0
    %730 = vmatprep.subr.mxu0 0.0
    %731 = vmatpush1.msra.mxu0 0.0
    %732 = vmatprep.subr.mxu0 0.0
    %733 = vmatpush1.msra.mxu0 0.0
    %734 = vmatprep.subr.mxu0 0.0
    %735 = vmatpush1.msra.mxu0 0.0
    %736 = vmatprep.subr.mxu0 0.0
    %737 = vmatpush1.msra.mxu0 0.0
    %738 = vmatprep.subr.mxu0 0.0
    %739 = vmatpush1.msra.mxu0 0.0
    %740 = vmatprep.subr.mxu0 0.0
    %741 = vmatpush1.msra.mxu0 0.0
    %742 = vmatprep.subr.mxu0 0.0
    %743 = vmatpush1.msra.mxu0 0.0
    %744 = vmatprep.subr.mxu0 0.0
    %745 = vmatpush1.msra.mxu0 0.0
    %746 = vmatprep.subr.mxu0 0.0
    %747 = vmatpush1.msra.mxu0 0.0
    %748 = vmatprep.mubr.f32.mxu0 0.0
    %v749 = vand.u32 %v516, 4294901760
    %v750 = vsub.f32 %v516, %v749
    %751 = vmatmul.mubr.f32.gmra.mrb[0].mxu0 %v750
    %v752 = vpop.f32.mrb[0].mxu0
    %v753 = vadd.f32 %v677, %v752
    %v754 = vpop.f32.mrb[0].mxu0
    %755 = vdwg.mxu0
    %756 = vmatprep.subr.mxu0 0.0
    %v757 = vand.u32 %v512, 4294901760
    %758 = vmatpush1.msra.mxu0 %v757
    %759 = vmatprep.subr.mxu0 0.0
    %v760 = vand.u32 %v520, 4294901760
    %761 = vmatpush1.msra.mxu0 %v760
    %762 = vmatprep.subr.mxu0 0.0
    %763 = vmatpush1.msra.mxu0 0.0
    %764 = vmatprep.subr.mxu0 0.0
    %765 = vmatpush1.msra.mxu0 0.0
    %766 = vmatprep.subr.mxu0 0.0
    %767 = vmatpush1.msra.mxu0 0.0
    %768 = vmatprep.subr.mxu0 0.0
    %769 = vmatpush1.msra.mxu0 0.0
    %770 = vmatprep.subr.mxu0 0.0
    %771 = vmatpush1.msra.mxu0 0.0
    %772 = vmatprep.subr.mxu0 0.0
    %773 = vmatpush1.msra.mxu0 0.0
    %774 = vmatprep.subr.mxu0 0.0
    %775 = vmatpush1.msra.mxu0 0.0
    %776 = vmatprep.subr.mxu0 0.0
    %777 = vmatpush1.msra.mxu0 0.0
    %778 = vmatprep.subr.mxu0 0.0
    %779 = vmatpush1.msra.mxu0 0.0
    %780 = vmatprep.subr.mxu0 0.0
    %781 = vmatpush1.msra.mxu0 0.0
    %782 = vmatprep.subr.mxu0 0.0
    %783 = vmatpush1.msra.mxu0 0.0
    %784 = vmatprep.subr.mxu0 0.0
    %785 = vmatpush1.msra.mxu0 0.0
    %786 = vmatprep.subr.mxu0 0.0
    %787 = vmatpush1.msra.mxu0 0.0
    %788 = vmatprep.subr.mxu0 0.0
    %789 = vmatpush1.msra.mxu0 0.0
    %790 = vmatprep.subr.mxu0 0.0
    %791 = vmatpush1.msra.mxu0 0.0
    %792 = vmatprep.subr.mxu0 0.0
    %793 = vmatpush1.msra.mxu0 0.0
    %794 = vmatprep.subr.mxu0 0.0
    %795 = vmatpush1.msra.mxu0 0.0
    %796 = vmatprep.subr.mxu0 0.0
    %797 = vmatpush1.msra.mxu0 0.0
    %798 = vmatprep.subr.mxu0 0.0
    %799 = vmatpush1.msra.mxu0 0.0
    %800 = vmatprep.subr.mxu0 0.0
    %801 = vmatpush1.msra.mxu0 0.0
    %802 = vmatprep.subr.mxu0 0.0
    %803 = vmatpush1.msra.mxu0 0.0
    %804 = vmatprep.subr.mxu0 0.0
    %805 = vmatpush1.msra.mxu0 0.0
    %806 = vmatprep.subr.mxu0 0.0
    %807 = vmatpush1.msra.mxu0 0.0
    %808 = vmatprep.subr.mxu0 0.0
    %809 = vmatpush1.msra.mxu0 0.0
    %810 = vmatprep.subr.mxu0 0.0
    %811 = vmatpush1.msra.mxu0 0.0
    %812 = vmatprep.subr.mxu0 0.0
    %813 = vmatpush1.msra.mxu0 0.0
    %814 = vmatprep.subr.mxu0 0.0
    %815 = vmatpush1.msra.mxu0 0.0
    %816 = vmatprep.subr.mxu0 0.0
    %817 = vmatpush1.msra.mxu0 0.0
    %818 = vmatprep.subr.mxu0 0.0
    %819 = vmatpush1.msra.mxu0 0.0
    %820 = vmatprep.subr.mxu0 0.0
    %821 = vmatpush1.msra.mxu0 0.0
    %822 = vmatprep.mubr.f32.mxu0 0.0
    %v823 = vand.u32 %v516, 4294901760
    %v824 = vsub.f32 %v516, %v823
    %v825 = vand.u32 %v824, 4294901760
    %826 = vmatmul.mubr.f32.gmra.mrb[0].mxu0 %v825
    %v827 = vpop.f32.mrb[0].mxu0
    %v828 = vadd.f32 %v753, %v827
    %v829 = vpop.f32.mrb[0].mxu0
    %830 = vdwg.mxu0
    %831 = vmatprep.subr.mxu0 0.0
    %v832 = vand.u32 %v512, 4294901760
    %v833 = vsub.f32 %v512, %v832
    %v834 = vand.u32 %v833, 4294901760
    %835 = vmatpush1.msra.mxu0 %v834
    %836 = vmatprep.subr.mxu0 0.0
    %v837 = vand.u32 %v520, 4294901760
    %v838 = vsub.f32 %v520, %v837
    %v839 = vand.u32 %v838, 4294901760
    %840 = vmatpush1.msra.mxu0 %v839
    %841 = vmatprep.subr.mxu0 0.0
    %842 = vmatpush1.msra.mxu0 0.0
    %843 = vmatprep.subr.mxu0 0.0
    %844 = vmatpush1.msra.mxu0 0.0
    %845 = vmatprep.subr.mxu0 0.0
    %846 = vmatpush1.msra.mxu0 0.0
    %847 = vmatprep.subr.mxu0 0.0
    %848 = vmatpush1.msra.mxu0 0.0
    %849 = vmatprep.subr.mxu0 0.0
    %850 = vmatpush1.msra.mxu0 0.0
    %851 = vmatprep.subr.mxu0 0.0
    %852 = vmatpush1.msra.mxu0 0.0
    %853 = vmatprep.subr.mxu0 0.0
    %854 = vmatpush1.msra.mxu0 0.0
    %855 = vmatprep.subr.mxu0 0.0
    %856 = vmatpush1.msra.mxu0 0.0
    %857 = vmatprep.subr.mxu0 0.0
    %858 = vmatpush1.msra.mxu0 0.0
    %859 = vmatprep.subr.mxu0 0.0
    %860 = vmatpush1.msra.mxu0 0.0
    %861 = vmatprep.subr.mxu0 0.0
    %862 = vmatpush1.msra.mxu0 0.0
    %863 = vmatprep.subr.mxu0 0.0
    %864 = vmatpush1.msra.mxu0 0.0
    %865 = vmatprep.subr.mxu0 0.0
    %866 = vmatpush1.msra.mxu0 0.0
    %867 = vmatprep.subr.mxu0 0.0
    %868 = vmatpush1.msra.mxu0 0.0
    %869 = vmatprep.subr.mxu0 0.0
    %870 = vmatpush1.msra.mxu0 0.0
    %871 = vmatprep.subr.mxu0 0.0
    %872 = vmatpush1.msra.mxu0 0.0
    %873 = vmatprep.subr.mxu0 0.0
    %874 = vmatpush1.msra.mxu0 0.0
    %875 = vmatprep.subr.mxu0 0.0
    %876 = vmatpush1.msra.mxu0 0.0
    %877 = vmatprep.subr.mxu0 0.0
    %878 = vmatpush1.msra.mxu0 0.0
    %879 = vmatprep.subr.mxu0 0.0
    %880 = vmatpush1.msra.mxu0 0.0
    %881 = vmatprep.subr.mxu0 0.0
    %882 = vmatpush1.msra.mxu0 0.0
    %883 = vmatprep.subr.mxu0 0.0
    %884 = vmatpush1.msra.mxu0 0.0
    %885 = vmatprep.subr.mxu0 0.0
    %886 = vmatpush1.msra.mxu0 0.0
    %887 = vmatprep.subr.mxu0 0.0
    %888 = vmatpush1.msra.mxu0 0.0
    %889 = vmatprep.subr.mxu0 0.0
    %890 = vmatpush1.msra.mxu0 0.0
    %891 = vmatprep.subr.mxu0 0.0
    %892 = vmatpush1.msra.mxu0 0.0
    %893 = vmatprep.subr.mxu0 0.0
    %894 = vmatpush1.msra.mxu0 0.0
    %895 = vmatprep.subr.mxu0 0.0
    %896 = vmatpush1.msra.mxu0 0.0
    %897 = vmatprep.subr.mxu0 0.0
    %898 = vmatpush1.msra.mxu0 0.0
    %899 = vmatprep.subr.mxu0 0.0
    %900 = vmatpush1.msra.mxu0 0.0
    %901 = vmatprep.mubr.f32.mxu0 0.0
    %v902 = vand.u32 %v516, 4294901760
    %903 = vmatmul.mubr.f32.gmra.mrb[0].mxu0 %v902
    %v904 = vpop.f32.mrb[0].mxu0
    %v905 = vadd.f32 %v828, %v904
    %v906 = vpop.f32.mrb[0].mxu0
    %907 = vdwg.mxu0
    %908 = vmatprep.subr.mxu0 0.0
    %v909 = vand.u32 %v512, 4294901760
    %910 = vmatpush1.msra.mxu0 %v909
    %911 = vmatprep.subr.mxu0 0.0
    %v912 = vand.u32 %v520, 4294901760
    %913 = vmatpush1.msra.mxu0 %v912
    %914 = vmatprep.subr.mxu0 0.0
    %915 = vmatpush1.msra.mxu0 0.0
    %916 = vmatprep.subr.mxu0 0.0
    %917 = vmatpush1.msra.mxu0 0.0
    %918 = vmatprep.subr.mxu0 0.0
    %919 = vmatpush1.msra.mxu0 0.0
    %920 = vmatprep.subr.mxu0 0.0
    %921 = vmatpush1.msra.mxu0 0.0
    %922 = vmatprep.subr.mxu0 0.0
    %923 = vmatpush1.msra.mxu0 0.0
    %924 = vmatprep.subr.mxu0 0.0
    %925 = vmatpush1.msra.mxu0 0.0
    %926 = vmatprep.subr.mxu0 0.0
    %927 = vmatpush1.msra.mxu0 0.0
    %928 = vmatprep.subr.mxu0 0.0
    %929 = vmatpush1.msra.mxu0 0.0
    %930 = vmatprep.subr.mxu0 0.0
    %931 = vmatpush1.msra.mxu0 0.0
    %932 = vmatprep.subr.mxu0 0.0
    %933 = vmatpush1.msra.mxu0 0.0
    %934 = vmatprep.subr.mxu0 0.0
    %935 = vmatpush1.msra.mxu0 0.0
    %936 = vmatprep.subr.mxu0 0.0
    %937 = vmatpush1.msra.mxu0 0.0
    %938 = vmatprep.subr.mxu0 0.0
    %939 = vmatpush1.msra.mxu0 0.0
    %940 = vmatprep.subr.mxu0 0.0
    %941 = vmatpush1.msra.mxu0 0.0
    %942 = vmatprep.subr.mxu0 0.0
    %943 = vmatpush1.msra.mxu0 0.0
    %944 = vmatprep.subr.mxu0 0.0
    %945 = vmatpush1.msra.mxu0 0.0
    %946 = vmatprep.subr.mxu0 0.0
    %947 = vmatpush1.msra.mxu0 0.0
    %948 = vmatprep.subr.mxu0 0.0
    %949 = vmatpush1.msra.mxu0 0.0
    %950 = vmatprep.subr.mxu0 0.0
    %951 = vmatpush1.msra.mxu0 0.0
    %952 = vmatprep.subr.mxu0 0.0
    %953 = vmatpush1.msra.mxu0 0.0
    %954 = vmatprep.subr.mxu0 0.0
    %955 = vmatpush1.msra.mxu0 0.0
    %956 = vmatprep.subr.mxu0 0.0
    %957 = vmatpush1.msra.mxu0 0.0
    %958 = vmatprep.subr.mxu0 0.0
    %959 = vmatpush1.msra.mxu0 0.0
    %960 = vmatprep.subr.mxu0 0.0
    %961 = vmatpush1.msra.mxu0 0.0
    %962 = vmatprep.subr.mxu0 0.0
    %963 = vmatpush1.msra.mxu0 0.0
    %964 = vmatprep.subr.mxu0 0.0
    %965 = vmatpush1.msra.mxu0 0.0
    %966 = vmatprep.subr.mxu0 0.0
    %967 = vmatpush1.msra.mxu0 0.0
    %968 = vmatprep.subr.mxu0 0.0
    %969 = vmatpush1.msra.mxu0 0.0
    %970 = vmatprep.subr.mxu0 0.0
    %971 = vmatpush1.msra.mxu0 0.0
    %972 = vmatprep.subr.mxu0 0.0
    %973 = vmatpush1.msra.mxu0 0.0
    %974 = vmatprep.mubr.f32.mxu0 0.0
    %v975 = vand.u32 %v516, 4294901760
    %976 = vmatmul.mubr.f32.gmra.mrb[0].mxu0 %v975
    %v977 = vpop.f32.mrb[0].mxu0
    %v978 = vadd.f32 %v905, %v977
    %v979 = vpop.f32.mrb[0].mxu0
    %980 = vdwg.mxu0
    %vm981 = vcmask 261120
    %982 = vst.msk [vmem:[#allocation4] sm:$0xff] %vm981, %v509
    %v983 = vld [vmem:[%s4] sm:$0xff]
    %v984 = vld [vmem:[%s5] sm:$0xff]
    %v985 = vld [vmem:[%s5 + $0x8] sm:$0xff]
    %v986 = vld [vmem:[%s6] sm:$0xff]
    %v987 = vld [vmem:[%s6 + $0x8] sm:$0xff]
    %v988 = vld [vmem:[%s6 + $0x10] sm:$0xff]
    %v989 = vld [vmem:[%s6 + $0x18] sm:$0xff]
    %v990 = vld [vmem:[%s6 + $0x20] sm:$0xff]
    %v991 = vld [vmem:[%s6 + $0x28] sm:$0xff]
    %v992 = vld [vmem:[%s6 + $0x30] sm:$0xff]
    %v993 = vld [vmem:[%s6 + $0x38] sm:$0xff]
    %v994 = vld [vmem:[%s6 + $0x40] sm:$0xff]
    %v995 = vld [vmem:[%s6 + $0x48] sm:$0xff]
    %v996 = vld [vmem:[%s6 + $0x50] sm:$0xff]
    %v997 = vld [vmem:[%s6 + $0x58] sm:$0xff]
    %v998 = vld [vmem:[%s6 + $0x60] sm:$0xff]
    %v999 = vld [vmem:[%s6 + $0x68] sm:$0xff]
    %v1000 = vld [vmem:[%s6 + $0x70] sm:$0xff]
    %v1001 = vld [vmem:[%s6 + $0x78] sm:$0xff]
    %v1002 = vld [vmem:[%s6 + $0x80] sm:$0xff]
    %v1003 = vld [vmem:[%s6 + $0x88] sm:$0xff]
    %v1004 = vld [vmem:[%s6 + $0x90] sm:$0xff]
    %v1005 = vld [vmem:[%s6 + $0x98] sm:$0xff]
    %v1006 = vld [vmem:[%s6 + $0xa0] sm:$0xff]
    %v1007 = vld [vmem:[%s6 + $0xa8] sm:$0xff]
    %v1008 = vld [vmem:[%s6 + $0xb0] sm:$0xff]
    %v1009 = vld [vmem:[%s6 + $0xb8] sm:$0xff]
    %v1010 = vld [vmem:[%s6 + $0xc0] sm:$0xff]
    %v1011 = vld [vmem:[%s6 + $0xc8] sm:$0xff]
    %v1012 = vld [vmem:[%s6 + $0xd0] sm:$0xff]
    %v1013 = vld [vmem:[%s6 + $0xd8] sm:$0xff]
    %v1014 = vld [vmem:[%s6 + $0xe0] sm:$0xff]
    %v1015 = vld [vmem:[%s6 + $0xe8] sm:$0xff]
    %v1016 = vld [vmem:[%s6 + $0xf0] sm:$0xff]
    %v1017 = vld [vmem:[%s6 + $0xf8] sm:$0xff]
    %v1019 = vsel %vm981, %v509, 0
    %v1022 = vsel %vm981, %v983, 0
    %1024 = vmatprep.subr.mxu0 0.0
    %v1025 = vand.u32 %v1022, 4294901760
    %1026 = vmatpush1.xpose.msra.mxu0 %v1025
    %1027 = vmatprep.subr.mxu0 0.0
    %1028 = vmatpush1.xpose.msra.mxu0 0.0
    %1029 = vmatprep.subr.mxu0 0.0
    %1030 = vmatpush1.xpose.msra.mxu0 0.0
    %1031 = vmatprep.subr.mxu0 0.0
    %1032 = vmatpush1.xpose.msra.mxu0 0.0
    %1033 = vmatprep.subr.mxu0 0.0
    %1034 = vmatpush1.xpose.msra.mxu0 0.0
    %1035 = vmatprep.subr.mxu0 0.0
    %1036 = vmatpush1.xpose.msra.mxu0 0.0
    %1037 = vmatprep.subr.mxu0 0.0
    %1038 = vmatpush1.xpose.msra.mxu0 0.0
    %1039 = vmatprep.subr.mxu0 0.0
    %1040 = vmatpush1.xpose.msra.mxu0 0.0
    %1041 = vmatprep.subr.mxu0 0.0
    %1042 = vmatpush1.xpose.msra.mxu0 0.0
    %1043 = vmatprep.subr.mxu0 0.0
    %1044 = vmatpush1.xpose.msra.mxu0 0.0
    %1045 = vmatprep.subr.mxu0 0.0
    %1046 = vmatpush1.xpose.msra.mxu0 0.0
    %1047 = vmatprep.subr.mxu0 0.0
    %1048 = vmatpush1.xpose.msra.mxu0 0.0
    %1049 = vmatprep.subr.mxu0 0.0
    %1050 = vmatpush1.xpose.msra.mxu0 0.0
    %1051 = vmatprep.subr.mxu0 0.0
    %1052 = vmatpush1.xpose.msra.mxu0 0.0
    %1053 = vmatprep.subr.mxu0 0.0
    %1054 = vmatpush1.xpose.msra.mxu0 0.0
    %1055 = vmatprep.subr.mxu0 0.0
    %1056 = vmatpush1.xpose.msra.mxu0 0.0
    %1057 = vmatprep.subr.mxu0 0.0
    %1058 = vmatpush1.xpose.msra.mxu0 0.0
    %1059 = vmatprep.subr.mxu0 0.0
    %1060 = vmatpush1.xpose.msra.mxu0 0.0
    %1061 = vmatprep.subr.mxu0 0.0
    %1062 = vmatpush1.xpose.msra.mxu0 0.0
    %1063 = vmatprep.subr.mxu0 0.0
    %1064 = vmatpush1.xpose.msra.mxu0 0.0
    %1065 = vmatprep.subr.mxu0 0.0
    %1066 = vmatpush1.xpose.msra.mxu0 0.0
    %1067 = vmatprep.subr.mxu0 0.0
    %1068 = vmatpush1.xpose.msra.mxu0 0.0
    %1069 = vmatprep.subr.mxu0 0.0
    %1070 = vmatpush1.xpose.msra.mxu0 0.0
    %1071 = vmatprep.subr.mxu0 0.0
    %1072 = vmatpush1.xpose.msra.mxu0 0.0
    %1073 = vmatprep.subr.mxu0 0.0
    %1074 = vmatpush1.xpose.msra.mxu0 0.0
    %1075 = vmatprep.subr.mxu0 0.0
    %1076 = vmatpush1.xpose.msra.mxu0 0.0
    %1077 = vmatprep.subr.mxu0 0.0
    %1078 = vmatpush1.xpose.msra.mxu0 0.0
    %1079 = vmatprep.subr.mxu0 0.0
    %1080 = vmatpush1.xpose.msra.mxu0 0.0
    %1081 = vmatprep.subr.mxu0 0.0
    %1082 = vmatpush1.xpose.msra.mxu0 0.0
    %1083 = vmatprep.subr.mxu0 0.0
    %1084 = vmatpush1.xpose.msra.mxu0 0.0
    %1085 = vmatprep.subr.mxu0 0.0
    %1086 = vmatpush1.xpose.msra.mxu0 0.0
    %1087 = vmatprep.subr.mxu0 0.0
    %1088 = vmatpush1.xpose.msra.mxu0 0.0
    %1089 = vmatprep.mubr.f32.mxu0 0.0
    %v1090 = vand.u32 %v1019, 4294901760
    %v1091 = vsub.f32 %v1019, %v1090
    %v1092 = vand.u32 %v1091, 4294901760
    %v1093 = vsub.f32 %v1091, %v1092
    %v1094 = vand.u32 %v1093, 4294901760
    %1095 = vmatmul.mubr.f32.gmra.mrb[0].mxu0 %v1094
    %v1096 = vpop.f32.mrb[0].mxu0
    %v1097 = vadd.f32 0.0, %v1096
    %v1098 = vpop.f32.mrb[0].mxu0
    %1099 = vdwg.mxu0
    %1100 = vmatprep.subr.mxu0 0.0
    %v1101 = vand.u32 %v1022, 4294901760
    %v1102 = vsub.f32 %v1022, %v1101
    %v1103 = vand.u32 %v1102, 4294901760
    %v1104 = vsub.f32 %v1102, %v1103
    %v1105 = vand.u32 %v1104, 4294901760
    %1106 = vmatpush1.xpose.msra.mxu0 %v1105
    %1107 = vmatprep.subr.mxu0 0.0
    %1108 = vmatpush1.xpose.msra.mxu0 0.0
    %1109 = vmatprep.subr.mxu0 0.0
    %1110 = vmatpush1.xpose.msra.mxu0 0.0
    %1111 = vmatprep.subr.mxu0 0.0
    %1112 = vmatpush1.xpose.msra.mxu0 0.0
    %1113 = vmatprep.subr.mxu0 0.0
    %1114 = vmatpush1.xpose.msra.mxu0 0.0
    %1115 = vmatprep.subr.mxu0 0.0
    %1116 = vmatpush1.xpose.msra.mxu0 0.0
    %1117 = vmatprep.subr.mxu0 0.0
    %1118 = vmatpush1.xpose.msra.mxu0 0.0
    %1119 = vmatprep.subr.mxu0 0.0
    %1120 = vmatpush1.xpose.msra.mxu0 0.0
    %1121 = vmatprep.subr.mxu0 0.0
    %1122 = vmatpush1.xpose.msra.mxu0 0.0
    %1123 = vmatprep.subr.mxu0 0.0
    %1124 = vmatpush1.xpose.msra.mxu0 0.0
    %1125 = vmatprep.subr.mxu0 0.0
    %1126 = vmatpush1.xpose.msra.mxu0 0.0
    %1127 = vmatprep.subr.mxu0 0.0
    %1128 = vmatpush1.xpose.msra.mxu0 0.0
    %1129 = vmatprep.subr.mxu0 0.0
    %1130 = vmatpush1.xpose.msra.mxu0 0.0
    %1131 = vmatprep.subr.mxu0 0.0
    %1132 = vmatpush1.xpose.msra.mxu0 0.0
    %1133 = vmatprep.subr.mxu0 0.0
    %1134 = vmatpush1.xpose.msra.mxu0 0.0
    %1135 = vmatprep.subr.mxu0 0.0
    %1136 = vmatpush1.xpose.msra.mxu0 0.0
    %1137 = vmatprep.subr.mxu0 0.0
    %1138 = vmatpush1.xpose.msra.mxu0 0.0
    %1139 = vmatprep.subr.mxu0 0.0
    %1140 = vmatpush1.xpose.msra.mxu0 0.0
    %1141 = vmatprep.subr.mxu0 0.0
    %1142 = vmatpush1.xpose.msra.mxu0 0.0
    %1143 = vmatprep.subr.mxu0 0.0
    %1144 = vmatpush1.xpose.msra.mxu0 0.0
    %1145 = vmatprep.subr.mxu0 0.0
    %1146 = vmatpush1.xpose.msra.mxu0 0.0
    %1147 = vmatprep.subr.mxu0 0.0
    %1148 = vmatpush1.xpose.msra.mxu0 0.0
    %1149 = vmatprep.subr.mxu0 0.0
    %1150 = vmatpush1.xpose.msra.mxu0 0.0
    %1151 = vmatprep.subr.mxu0 0.0
    %1152 = vmatpush1.xpose.msra.mxu0 0.0
    %1153 = vmatprep.subr.mxu0 0.0
    %1154 = vmatpush1.xpose.msra.mxu0 0.0
    %1155 = vmatprep.subr.mxu0 0.0
    %1156 = vmatpush1.xpose.msra.mxu0 0.0
    %1157 = vmatprep.subr.mxu0 0.0
    %1158 = vmatpush1.xpose.msra.mxu0 0.0
    %1159 = vmatprep.subr.mxu0 0.0
    %1160 = vmatpush1.xpose.msra.mxu0 0.0
    %1161 = vmatprep.subr.mxu0 0.0
    %1162 = vmatpush1.xpose.msra.mxu0 0.0
    %1163 = vmatprep.subr.mxu0 0.0
    %1164 = vmatpush1.xpose.msra.mxu0 0.0
    %1165 = vmatprep.subr.mxu0 0.0
    %1166 = vmatpush1.xpose.msra.mxu0 0.0
    %1167 = vmatprep.subr.mxu0 0.0
    %1168 = vmatpush1.xpose.msra.mxu0 0.0
    %1169 = vmatprep.mubr.f32.mxu0 0.0
    %v1170 = vand.u32 %v1019, 4294901760
    %1171 = vmatmul.mubr.f32.gmra.mrb[0].mxu0 %v1170
    %v1172 = vpop.f32.mrb[0].mxu0
    %v1173 = vadd.f32 %v1097, %v1172
    %v1174 = vpop.f32.mrb[0].mxu0
    %1175 = vdwg.mxu0
    %1176 = vmatprep.subr.mxu0 0.0
    %v1177 = vand.u32 %v1022, 4294901760
    %v1178 = vsub.f32 %v1022, %v1177
    %1179 = vmatpush1.xpose.msra.mxu0 %v1178
    %1180 = vmatprep.subr.mxu0 0.0
    %1181 = vmatpush1.xpose.msra.mxu0 0.0
    %1182 = vmatprep.subr.mxu0 0.0
    %1183 = vmatpush1.xpose.msra.mxu0 0.0
    %1184 = vmatprep.subr.mxu0 0.0
    %1185 = vmatpush1.xpose.msra.mxu0 0.0
    %1186 = vmatprep.subr.mxu0 0.0
    %1187 = vmatpush1.xpose.msra.mxu0 0.0
    %1188 = vmatprep.subr.mxu0 0.0
    %1189 = vmatpush1.xpose.msra.mxu0 0.0
    %1190 = vmatprep.subr.mxu0 0.0
    %1191 = vmatpush1.xpose.msra.mxu0 0.0
    %1192 = vmatprep.subr.mxu0 0.0
    %1193 = vmatpush1.xpose.msra.mxu0 0.0
    %1194 = vmatprep.subr.mxu0 0.0
    %1195 = vmatpush1.xpose.msra.mxu0 0.0
    %1196 = vmatprep.subr.mxu0 0.0
    %1197 = vmatpush1.xpose.msra.mxu0 0.0
    %1198 = vmatprep.subr.mxu0 0.0
    %1199 = vmatpush1.xpose.msra.mxu0 0.0
    %1200 = vmatprep.subr.mxu0 0.0
    %1201 = vmatpush1.xpose.msra.mxu0 0.0
    %1202 = vmatprep.subr.mxu0 0.0
    %1203 = vmatpush1.xpose.msra.mxu0 0.0
    %1204 = vmatprep.subr.mxu0 0.0
    %1205 = vmatpush1.xpose.msra.mxu0 0.0
    %1206 = vmatprep.subr.mxu0 0.0
    %1207 = vmatpush1.xpose.msra.mxu0 0.0
    %1208 = vmatprep.subr.mxu0 0.0
    %1209 = vmatpush1.xpose.msra.mxu0 0.0
    %1210 = vmatprep.subr.mxu0 0.0
    %1211 = vmatpush1.xpose.msra.mxu0 0.0
    %1212 = vmatprep.subr.mxu0 0.0
    %1213 = vmatpush1.xpose.msra.mxu0 0.0
    %1214 = vmatprep.subr.mxu0 0.0
    %1215 = vmatpush1.xpose.msra.mxu0 0.0
    %1216 = vmatprep.subr.mxu0 0.0
    %1217 = vmatpush1.xpose.msra.mxu0 0.0
    %1218 = vmatprep.subr.mxu0 0.0
    %1219 = vmatpush1.xpose.msra.mxu0 0.0
    %1220 = vmatprep.subr.mxu0 0.0
    %1221 = vmatpush1.xpose.msra.mxu0 0.0
    %1222 = vmatprep.subr.mxu0 0.0
    %1223 = vmatpush1.xpose.msra.mxu0 0.0
    %1224 = vmatprep.subr.mxu0 0.0
    %1225 = vmatpush1.xpose.msra.mxu0 0.0
    %1226 = vmatprep.subr.mxu0 0.0
    %1227 = vmatpush1.xpose.msra.mxu0 0.0
    %1228 = vmatprep.subr.mxu0 0.0
    %1229 = vmatpush1.xpose.msra.mxu0 0.0
    %1230 = vmatprep.subr.mxu0 0.0
    %1231 = vmatpush1.xpose.msra.mxu0 0.0
    %1232 = vmatprep.subr.mxu0 0.0
    %1233 = vmatpush1.xpose.msra.mxu0 0.0
    %1234 = vmatprep.subr.mxu0 0.0
    %1235 = vmatpush1.xpose.msra.mxu0 0.0
    %1236 = vmatprep.subr.mxu0 0.0
    %1237 = vmatpush1.xpose.msra.mxu0 0.0
    %1238 = vmatprep.subr.mxu0 0.0
    %1239 = vmatpush1.xpose.msra.mxu0 0.0
    %1240 = vmatprep.subr.mxu0 0.0
    %1241 = vmatpush1.xpose.msra.mxu0 0.0
    %1242 = vmatprep.mubr.f32.mxu0 0.0
    %v1243 = vand.u32 %v1019, 4294901760
    %v1244 = vsub.f32 %v1019, %v1243
    %1245 = vmatmul.mubr.f32.gmra.mrb[0].mxu0 %v1244
    %v1246 = vpop.f32.mrb[0].mxu0
    %v1247 = vadd.f32 %v1173, %v1246
    %v1248 = vpop.f32.mrb[0].mxu0
    %1249 = vdwg.mxu0
    %1250 = vmatprep.subr.mxu0 0.0
    %v1251 = vand.u32 %v1022, 4294901760
    %1252 = vmatpush1.xpose.msra.mxu0 %v1251
    %1253 = vmatprep.subr.mxu0 0.0
    %1254 = vmatpush1.xpose.msra.mxu0 0.0
    %1255 = vmatprep.subr.mxu0 0.0
    %1256 = vmatpush1.xpose.msra.mxu0 0.0
    %1257 = vmatprep.subr.mxu0 0.0
    %1258 = vmatpush1.xpose.msra.mxu0 0.0
    %1259 = vmatprep.subr.mxu0 0.0
    %1260 = vmatpush1.xpose.msra.mxu0 0.0
    %1261 = vmatprep.subr.mxu0 0.0
    %1262 = vmatpush1.xpose.msra.mxu0 0.0
    %1263 = vmatprep.subr.mxu0 0.0
    %1264 = vmatpush1.xpose.msra.mxu0 0.0
    %1265 = vmatprep.subr.mxu0 0.0
    %1266 = vmatpush1.xpose.msra.mxu0 0.0
    %1267 = vmatprep.subr.mxu0 0.0
    %1268 = vmatpush1.xpose.msra.mxu0 0.0
    %1269 = vmatprep.subr.mxu0 0.0
    %1270 = vmatpush1.xpose.msra.mxu0 0.0
    %1271 = vmatprep.subr.mxu0 0.0
    %1272 = vmatpush1.xpose.msra.mxu0 0.0
    %1273 = vmatprep.subr.mxu0 0.0
    %1274 = vmatpush1.xpose.msra.mxu0 0.0
    %1275 = vmatprep.subr.mxu0 0.0
    %1276 = vmatpush1.xpose.msra.mxu0 0.0
    %1277 = vmatprep.subr.mxu0 0.0
    %1278 = vmatpush1.xpose.msra.mxu0 0.0
    %1279 = vmatprep.subr.mxu0 0.0
    %1280 = vmatpush1.xpose.msra.mxu0 0.0
    %1281 = vmatprep.subr.mxu0 0.0
    %1282 = vmatpush1.xpose.msra.mxu0 0.0
    %1283 = vmatprep.subr.mxu0 0.0
    %1284 = vmatpush1.xpose.msra.mxu0 0.0
    %1285 = vmatprep.subr.mxu0 0.0
    %1286 = vmatpush1.xpose.msra.mxu0 0.0
    %1287 = vmatprep.subr.mxu0 0.0
    %1288 = vmatpush1.xpose.msra.mxu0 0.0
    %1289 = vmatprep.subr.mxu0 0.0
    %1290 = vmatpush1.xpose.msra.mxu0 0.0
    %1291 = vmatprep.subr.mxu0 0.0
    %1292 = vmatpush1.xpose.msra.mxu0 0.0
    %1293 = vmatprep.subr.mxu0 0.0
    %1294 = vmatpush1.xpose.msra.mxu0 0.0
    %1295 = vmatprep.subr.mxu0 0.0
    %1296 = vmatpush1.xpose.msra.mxu0 0.0
    %1297 = vmatprep.subr.mxu0 0.0
    %1298 = vmatpush1.xpose.msra.mxu0 0.0
    %1299 = vmatprep.subr.mxu0 0.0
    %1300 = vmatpush1.xpose.msra.mxu0 0.0
    %1301 = vmatprep.subr.mxu0 0.0
    %1302 = vmatpush1.xpose.msra.mxu0 0.0
    %1303 = vmatprep.subr.mxu0 0.0
    %1304 = vmatpush1.xpose.msra.mxu0 0.0
    %1305 = vmatprep.subr.mxu0 0.0
    %1306 = vmatpush1.xpose.msra.mxu0 0.0
    %1307 = vmatprep.subr.mxu0 0.0
    %1308 = vmatpush1.xpose.msra.mxu0 0.0
    %1309 = vmatprep.subr.mxu0 0.0
    %1310 = vmatpush1.xpose.msra.mxu0 0.0
    %1311 = vmatprep.subr.mxu0 0.0
    %1312 = vmatpush1.xpose.msra.mxu0 0.0
    %1313 = vmatprep.subr.mxu0 0.0
    %1314 = vmatpush1.xpose.msra.mxu0 0.0
    %1315 = vmatprep.mubr.f32.mxu0 0.0
    %v1316 = vand.u32 %v1019, 4294901760
    %v1317 = vsub.f32 %v1019, %v1316
    %v1318 = vand.u32 %v1317, 4294901760
    %1319 = vmatmul.mubr.f32.gmra.mrb[0].mxu0 %v1318
    %v1320 = vpop.f32.mrb[0].mxu0
    %v1321 = vadd.f32 %v1247, %v1320
    %v1322 = vpop.f32.mrb[0].mxu0
    %1323 = vdwg.mxu0
    %1324 = vmatprep.subr.mxu0 0.0
    %v1325 = vand.u32 %v1022, 4294901760
    %v1326 = vsub.f32 %v1022, %v1325
    %v1327 = vand.u32 %v1326, 4294901760
    %1328 = vmatpush1.xpose.msra.mxu0 %v1327
    %1329 = vmatprep.subr.mxu0 0.0
    %1330 = vmatpush1.xpose.msra.mxu0 0.0
    %1331 = vmatprep.subr.mxu0 0.0
    %1332 = vmatpush1.xpose.msra.mxu0 0.0
    %1333 = vmatprep.subr.mxu0 0.0
    %1334 = vmatpush1.xpose.msra.mxu0 0.0
    %1335 = vmatprep.subr.mxu0 0.0
    %1336 = vmatpush1.xpose.msra.mxu0 0.0
    %1337 = vmatprep.subr.mxu0 0.0
    %1338 = vmatpush1.xpose.msra.mxu0 0.0
    %1339 = vmatprep.subr.mxu0 0.0
    %1340 = vmatpush1.xpose.msra.mxu0 0.0
    %1341 = vmatprep.subr.mxu0 0.0
    %1342 = vmatpush1.xpose.msra.mxu0 0.0
    %1343 = vmatprep.subr.mxu0 0.0
    %1344 = vmatpush1.xpose.msra.mxu0 0.0
    %1345 = vmatprep.subr.mxu0 0.0
    %1346 = vmatpush1.xpose.msra.mxu0 0.0
    %1347 = vmatprep.subr.mxu0 0.0
    %1348 = vmatpush1.xpose.msra.mxu0 0.0
    %1349 = vmatprep.subr.mxu0 0.0
    %1350 = vmatpush1.xpose.msra.mxu0 0.0
    %1351 = vmatprep.subr.mxu0 0.0
    %1352 = vmatpush1.xpose.msra.mxu0 0.0
    %1353 = vmatprep.subr.mxu0 0.0
    %1354 = vmatpush1.xpose.msra.mxu0 0.0
    %1355 = vmatprep.subr.mxu0 0.0
    %1356 = vmatpush1.xpose.msra.mxu0 0.0
    %1357 = vmatprep.subr.mxu0 0.0
    %1358 = vmatpush1.xpose.msra.mxu0 0.0
    %1359 = vmatprep.subr.mxu0 0.0
    %1360 = vmatpush1.xpose.msra.mxu0 0.0
    %1361 = vmatprep.subr.mxu0 0.0
    %1362 = vmatpush1.xpose.msra.mxu0 0.0
    %1363 = vmatprep.subr.mxu0 0.0
    %1364 = vmatpush1.xpose.msra.mxu0 0.0
    %1365 = vmatprep.subr.mxu0 0.0
    %1366 = vmatpush1.xpose.msra.mxu0 0.0
    %1367 = vmatprep.subr.mxu0 0.0
    %1368 = vmatpush1.xpose.msra.mxu0 0.0
    %1369 = vmatprep.subr.mxu0 0.0
    %1370 = vmatpush1.xpose.msra.mxu0 0.0
    %1371 = vmatprep.subr.mxu0 0.0
    %1372 = vmatpush1.xpose.msra.mxu0 0.0
    %1373 = vmatprep.subr.mxu0 0.0
    %1374 = vmatpush1.xpose.msra.mxu0 0.0
    %1375 = vmatprep.subr.mxu0 0.0
    %1376 = vmatpush1.xpose.msra.mxu0 0.0
    %1377 = vmatprep.subr.mxu0 0.0
    %1378 = vmatpush1.xpose.msra.mxu0 0.0
    %1379 = vmatprep.subr.mxu0 0.0
    %1380 = vmatpush1.xpose.msra.mxu0 0.0
    %1381 = vmatprep.subr.mxu0 0.0
    %1382 = vmatpush1.xpose.msra.mxu0 0.0
    %1383 = vmatprep.subr.mxu0 0.0
    %1384 = vmatpush1.xpose.msra.mxu0 0.0
    %1385 = vmatprep.subr.mxu0 0.0
    %1386 = vmatpush1.xpose.msra.mxu0 0.0
    %1387 = vmatprep.subr.mxu0 0.0
    %1388 = vmatpush1.xpose.msra.mxu0 0.0
    %1389 = vmatprep.subr.mxu0 0.0
    %1390 = vmatpush1.xpose.msra.mxu0 0.0
    %1391 = vmatprep.mubr.f32.mxu0 0.0
    %v1392 = vand.u32 %v1019, 4294901760
    %1393 = vmatmul.mubr.f32.gmra.mrb[0].mxu0 %v1392
    %v1394 = vpop.f32.mrb[0].mxu0
    %v1395 = vadd.f32 %v1321, %v1394
    %v1396 = vpop.f32.mrb[0].mxu0
    %1397 = vdwg.mxu0
    %1398 = vmatprep.subr.mxu0 0.0
    %v1399 = vand.u32 %v1022, 4294901760
    %1400 = vmatpush1.xpose.msra.mxu0 %v1399
    %1401 = vmatprep.subr.mxu0 0.0
    %1402 = vmatpush1.xpose.msra.mxu0 0.0
    %1403 = vmatprep.subr.mxu0 0.0
    %1404 = vmatpush1.xpose.msra.mxu0 0.0
    %1405 = vmatprep.subr.mxu0 0.0
    %1406 = vmatpush1.xpose.msra.mxu0 0.0
    %1407 = vmatprep.subr.mxu0 0.0
    %1408 = vmatpush1.xpose.msra.mxu0 0.0
    %1409 = vmatprep.subr.mxu0 0.0
    %1410 = vmatpush1.xpose.msra.mxu0 0.0
    %1411 = vmatprep.subr.mxu0 0.0
    %1412 = vmatpush1.xpose.msra.mxu0 0.0
    %1413 = vmatprep.subr.mxu0 0.0
    %1414 = vmatpush1.xpose.msra.mxu0 0.0
    %1415 = vmatprep.subr.mxu0 0.0
    %1416 = vmatpush1.xpose.msra.mxu0 0.0
    %1417 = vmatprep.subr.mxu0 0.0
    %1418 = vmatpush1.xpose.msra.mxu0 0.0
    %1419 = vmatprep.subr.mxu0 0.0
    %1420 = vmatpush1.xpose.msra.mxu0 0.0
    %1421 = vmatprep.subr.mxu0 0.0
    %1422 = vmatpush1.xpose.msra.mxu0 0.0
    %1423 = vmatprep.subr.mxu0 0.0
    %1424 = vmatpush1.xpose.msra.mxu0 0.0
    %1425 = vmatprep.subr.mxu0 0.0
    %1426 = vmatpush1.xpose.msra.mxu0 0.0
    %1427 = vmatprep.subr.mxu0 0.0
    %1428 = vmatpush1.xpose.msra.mxu0 0.0
    %1429 = vmatprep.subr.mxu0 0.0
    %1430 = vmatpush1.xpose.msra.mxu0 0.0
    %1431 = vmatprep.subr.mxu0 0.0
    %1432 = vmatpush1.xpose.msra.mxu0 0.0
    %1433 = vmatprep.subr.mxu0 0.0
    %1434 = vmatpush1.xpose.msra.mxu0 0.0
    %1435 = vmatprep.subr.mxu0 0.0
    %1436 = vmatpush1.xpose.msra.mxu0 0.0
    %1437 = vmatprep.subr.mxu0 0.0
    %1438 = vmatpush1.xpose.msra.mxu0 0.0
    %1439 = vmatprep.subr.mxu0 0.0
    %1440 = vmatpush1.xpose.msra.mxu0 0.0
    %1441 = vmatprep.subr.mxu0 0.0
    %1442 = vmatpush1.xpose.msra.mxu0 0.0
    %1443 = vmatprep.subr.mxu0 0.0
    %1444 = vmatpush1.xpose.msra.mxu0 0.0
    %1445 = vmatprep.subr.mxu0 0.0
    %1446 = vmatpush1.xpose.msra.mxu0 0.0
    %1447 = vmatprep.subr.mxu0 0.0
    %1448 = vmatpush1.xpose.msra.mxu0 0.0
    %1449 = vmatprep.subr.mxu0 0.0
    %1450 = vmatpush1.xpose.msra.mxu0 0.0
    %1451 = vmatprep.subr.mxu0 0.0
    %1452 = vmatpush1.xpose.msra.mxu0 0.0
    %1453 = vmatprep.subr.mxu0 0.0
    %1454 = vmatpush1.xpose.msra.mxu0 0.0
    %1455 = vmatprep.subr.mxu0 0.0
    %1456 = vmatpush1.xpose.msra.mxu0 0.0
    %1457 = vmatprep.subr.mxu0 0.0
    %1458 = vmatpush1.xpose.msra.mxu0 0.0
    %1459 = vmatprep.subr.mxu0 0.0
    %1460 = vmatpush1.xpose.msra.mxu0 0.0
    %1461 = vmatprep.subr.mxu0 0.0
    %1462 = vmatpush1.xpose.msra.mxu0 0.0
    %1463 = vmatprep.mubr.f32.mxu0 0.0
    %v1464 = vand.u32 %v1019, 4294901760
    %1465 = vmatmul.mubr.f32.gmra.mrb[0].mxu0 %v1464
    %v1466 = vpop.f32.mrb[0].mxu0
    %v1467 = vadd.f32 %v1395, %v1466
    %v1468 = vpop.f32.mrb[0].mxu0
    %1469 = vdwg.mxu0
    %vm1470 = vcmask 64512
    %v1471 = vsel %vm1470, %v1467, -inf
    %1472 = vmax.xlane.f32.xlu0 %v1471
    %v1473 = vpop.xlane.xlu0 %1472
    %v1474 = vsub.f32 %v1467, %v1473
    %v1475 = vmul.f32 %v1474, 1.442695
    %v1476 = vpow.pop %v1475
    %v1477 = vsel %vm1470, %v1476, 0.0
    %1478 = vadd.xlane.f32.xlu0 %v1477
    %v1479 = vpop.xlane.xlu0 %1478
    %v1480 = vrcp.pop %v1479
    %v1481 = vmul.f32 %v1476, %v1480
    %v1483 = vsel %vm1470, %v1481, 0
    %v1485 = vand.u32 %v985, 4294901760
    %1486 = vmatprep.subr.mxu0 %v1485
    %v1487 = vand.u32 %v984, 4294901760
    %1488 = vmatpush1.msra.mxu0 %v1487
    %1489 = vmatprep.subr.mxu0 0.0
    %1490 = vmatpush1.msra.mxu0 0.0
    %1491 = vmatprep.subr.mxu0 0.0
    %1492 = vmatpush1.msra.mxu0 0.0
    %1493 = vmatprep.subr.mxu0 0.0
    %1494 = vmatpush1.msra.mxu0 0.0
    %1495 = vmatprep.subr.mxu0 0.0
    %1496 = vmatpush1.msra.mxu0 0.0
    %1497 = vmatprep.subr.mxu0 0.0
    %1498 = vmatpush1.msra.mxu0 0.0
    %1499 = vmatprep.subr.mxu0 0.0
    %1500 = vmatpush1.msra.mxu0 0.0
    %1501 = vmatprep.subr.mxu0 0.0
    %1502 = vmatpush1.msra.mxu0 0.0
    %1503 = vmatprep.subr.mxu0 0.0
    %1504 = vmatpush1.msra.mxu0 0.0
    %1505 = vmatprep.subr.mxu0 0.0
    %1506 = vmatpush1.msra.mxu0 0.0
    %1507 = vmatprep.subr.mxu0 0.0
    %1508 = vmatpush1.msra.mxu0 0.0
    %1509 = vmatprep.subr.mxu0 0.0
    %1510 = vmatpush1.msra.mxu0 0.0
    %1511 = vmatprep.subr.mxu0 0.0
    %1512 = vmatpush1.msra.mxu0 0.0
    %1513 = vmatprep.subr.mxu0 0.0
    %1514 = vmatpush1.msra.mxu0 0.0
    %1515 = vmatprep.subr.mxu0 0.0
    %1516 = vmatpush1.msra.mxu0 0.0
    %1517 = vmatprep.subr.mxu0 0.0
    %1518 = vmatpush1.msra.mxu0 0.0
    %1519 = vmatprep.subr.mxu0 0.0
    %1520 = vmatpush1.msra.mxu0 0.0
    %1521 = vmatprep.subr.mxu0 0.0
    %1522 = vmatpush1.msra.mxu0 0.0
    %1523 = vmatprep.subr.mxu0 0.0
    %1524 = vmatpush1.msra.mxu0 0.0
    %1525 = vmatprep.subr.mxu0 0.0
    %1526 = vmatpush1.msra.mxu0 0.0
    %1527 = vmatprep.subr.mxu0 0.0
    %1528 = vmatpush1.msra.mxu0 0.0
    %1529 = vmatprep.subr.mxu0 0.0
    %1530 = vmatpush1.msra.mxu0 0.0
    %1531 = vmatprep.subr.mxu0 0.0
    %1532 = vmatpush1.msra.mxu0 0.0
    %1533 = vmatprep.subr.mxu0 0.0
    %1534 = vmatpush1.msra.mxu0 0.0
    %1535 = vmatprep.subr.mxu0 0.0
    %1536 = vmatpush1.msra.mxu0 0.0
    %1537 = vmatprep.subr.mxu0 0.0
    %1538 = vmatpush1.msra.mxu0 0.0
    %1539 = vmatprep.subr.mxu0 0.0
    %1540 = vmatpush1.msra.mxu0 0.0
    %1541 = vmatprep.subr.mxu0 0.0
    %1542 = vmatpush1.msra.mxu0 0.0
    %1543 = vmatprep.subr.mxu0 0.0
    %1544 = vmatpush1.msra.mxu0 0.0
    %1545 = vmatprep.subr.mxu0 0.0
    %1546 = vmatpush1.msra.mxu0 0.0
    %1547 = vmatprep.subr.mxu0 0.0
    %1548 = vmatpush1.msra.mxu0 0.0
    %1549 = vmatprep.subr.mxu0 0.0
    %1550 = vmatpush1.msra.mxu0 0.0
    %1551 = vmatprep.mubr.f32.mxu0 0.0
    %v1552 = vand.u32 %v1483, 4294901760
    %v1553 = vsub.f32 %v1483, %v1552
    %v1554 = vand.u32 %v1553, 4294901760
    %v1555 = vsub.f32 %v1553, %v1554
    %v1556 = vand.u32 %v1555, 4294901760
    %1557 = vmatmul.mubr.f32.gmra.mrb[0].mxu0 %v1556
    %v1558 = vpop.f32.mrb[0].mxu0
    %v1559 = vadd.f32 0.0, %v1558
    %v1560 = vpop.f32.mrb[0].mxu0
    %v1561 = vadd.f32 0.0, %v1560
    %1562 = vdwg.mxu0
    %v1563 = vand.u32 %v985, 4294901760
    %v1564 = vsub.f32 %v985, %v1563
    %v1565 = vand.u32 %v1564, 4294901760
    %v1566 = vsub.f32 %v1564, %v1565
    %v1567 = vand.u32 %v1566, 4294901760
    %1568 = vmatprep.subr.mxu0 %v1567
    %v1569 = vand.u32 %v984, 4294901760
    %v1570 = vsub.f32 %v984, %v1569
    %v1571 = vand.u32 %v1570, 4294901760
    %v1572 = vsub.f32 %v1570, %v1571
    %v1573 = vand.u32 %v1572, 4294901760
    %1574 = vmatpush1.msra.mxu0 %v1573
    %1575 = vmatprep.subr.mxu0 0.0
    %1576 = vmatpush1.msra.mxu0 0.0
    %1577 = vmatprep.subr.mxu0 0.0
    %1578 = vmatpush1.msra.mxu0 0.0
    %1579 = vmatprep.subr.mxu0 0.0
    %1580 = vmatpush1.msra.mxu0 0.0
    %1581 = vmatprep.subr.mxu0 0.0
    %1582 = vmatpush1.msra.mxu0 0.0
    %1583 = vmatprep.subr.mxu0 0.0
    %1584 = vmatpush1.msra.mxu0 0.0
    %1585 = vmatprep.subr.mxu0 0.0
    %1586 = vmatpush1.msra.mxu0 0.0
    %1587 = vmatprep.subr.mxu0 0.0
    %1588 = vmatpush1.msra.mxu0 0.0
    %1589 = vmatprep.subr.mxu0 0.0
    %1590 = vmatpush1.msra.mxu0 0.0
    %1591 = vmatprep.subr.mxu0 0.0
    %1592 = vmatpush1.msra.mxu0 0.0
    %1593 = vmatprep.subr.mxu0 0.0
    %1594 = vmatpush1.msra.mxu0 0.0
    %1595 = vmatprep.subr.mxu0 0.0
    %1596 = vmatpush1.msra.mxu0 0.0
    %1597 = vmatprep.subr.mxu0 0.0
    %1598 = vmatpush1.msra.mxu0 0.0
    %1599 = vmatprep.subr.mxu0 0.0
    %1600 = vmatpush1.msra.mxu0 0.0
    %1601 = vmatprep.subr.mxu0 0.0
    %1602 = vmatpush1.msra.mxu0 0.0
    %1603 = vmatprep.subr.mxu0 0.0
    %1604 = vmatpush1.msra.mxu0 0.0
    %1605 = vmatprep.subr.mxu0 0.0
    %1606 = vmatpush1.msra.mxu0 0.0
    %1607 = vmatprep.subr.mxu0 0.0
    %1608 = vmatpush1.msra.mxu0 0.0
    %1609 = vmatprep.subr.mxu0 0.0
    %1610 = vmatpush1.msra.mxu0 0.0
    %1611 = vmatprep.subr.mxu0 0.0
    %1612 = vmatpush1.msra.mxu0 0.0
    %1613 = vmatprep.subr.mxu0 0.0
    %1614 = vmatpush1.msra.mxu0 0.0
    %1615 = vmatprep.subr.mxu0 0.0
    %1616 = vmatpush1.msra.mxu0 0.0
    %1617 = vmatprep.subr.mxu0 0.0
    %1618 = vmatpush1.msra.mxu0 0.0
    %1619 = vmatprep.subr.mxu0 0.0
    %1620 = vmatpush1.msra.mxu0 0.0
    %1621 = vmatprep.subr.mxu0 0.0
    %1622 = vmatpush1.msra.mxu0 0.0
    %1623 = vmatprep.subr.mxu0 0.0
    %1624 = vmatpush1.msra.mxu0 0.0
    %1625 = vmatprep.subr.mxu0 0.0
    %1626 = vmatpush1.msra.mxu0 0.0
    %1627 = vmatprep.subr.mxu0 0.0
    %1628 = vmatpush1.msra.mxu0 0.0
    %1629 = vmatprep.subr.mxu0 0.0
    %1630 = vmatpush1.msra.mxu0 0.0
    %1631 = vmatprep.subr.mxu0 0.0
    %1632 = vmatpush1.msra.mxu0 0.0
    %1633 = vmatprep.subr.mxu0 0.0
    %1634 = vmatpush1.msra.mxu0 0.0
    %1635 = vmatprep.subr.mxu0 0.0
    %1636 = vmatpush1.msra.mxu0 0.0
    %1637 = vmatprep.mubr.f32.mxu0 0.0
    %v1638 = vand.u32 %v1483, 4294901760
    %1639 = vmatmul.mubr.f32.gmra.mrb[0].mxu0 %v1638
    %v1640 = vpop.f32.mrb[0].mxu0
    %v1641 = vadd.f32 %v1559, %v1640
    %v1642 = vpop.f32.mrb[0].mxu0
    %v1643 = vadd.f32 %v1561, %v1642
    %1644 = vdwg.mxu0
    %v1645 = vand.u32 %v985, 4294901760
    %v1646 = vsub.f32 %v985, %v1645
    %1647 = vmatprep.subr.mxu0 %v1646
    %v1648 = vand.u32 %v984, 4294901760
    %v1649 = vsub.f32 %v984, %v1648
    %1650 = vmatpush1.msra.mxu0 %v1649
    %1651 = vmatprep.subr.mxu0 0.0
    %1652 = vmatpush1.msra.mxu0 0.0
    %1653 = vmatprep.subr.mxu0 0.0
    %1654 = vmatpush1.msra.mxu0 0.0
    %1655 = vmatprep.subr.mxu0 0.0
    %1656 = vmatpush1.msra.mxu0 0.0
    %1657 = vmatprep.subr.mxu0 0.0
    %1658 = vmatpush1.msra.mxu0 0.0
    %1659 = vmatprep.subr.mxu0 0.0
    %1660 = vmatpush1.msra.mxu0 0.0
    %1661 = vmatprep.subr.mxu0 0.0
    %1662 = vmatpush1.msra.mxu0 0.0
    %1663 = vmatprep.subr.mxu0 0.0
    %1664 = vmatpush1.msra.mxu0 0.0
    %1665 = vmatprep.subr.mxu0 0.0
    %1666 = vmatpush1.msra.mxu0 0.0
    %1667 = vmatprep.subr.mxu0 0.0
    %1668 = vmatpush1.msra.mxu0 0.0
    %1669 = vmatprep.subr.mxu0 0.0
    %1670 = vmatpush1.msra.mxu0 0.0
    %1671 = vmatprep.subr.mxu0 0.0
    %1672 = vmatpush1.msra.mxu0 0.0
    %1673 = vmatprep.subr.mxu0 0.0
    %1674 = vmatpush1.msra.mxu0 0.0
    %1675 = vmatprep.subr.mxu0 0.0
    %1676 = vmatpush1.msra.mxu0 0.0
    %1677 = vmatprep.subr.mxu0 0.0
    %1678 = vmatpush1.msra.mxu0 0.0
    %1679 = vmatprep.subr.mxu0 0.0
    %1680 = vmatpush1.msra.mxu0 0.0
    %1681 = vmatprep.subr.mxu0 0.0
    %1682 = vmatpush1.msra.mxu0 0.0
    %1683 = vmatprep.subr.mxu0 0.0
    %1684 = vmatpush1.msra.mxu0 0.0
    %1685 = vmatprep.subr.mxu0 0.0
    %1686 = vmatpush1.msra.mxu0 0.0
    %1687 = vmatprep.subr.mxu0 0.0
    %1688 = vmatpush1.msra.mxu0 0.0
    %1689 = vmatprep.subr.mxu0 0.0
    %1690 = vmatpush1.msra.mxu0 0.0
    %1691 = vmatprep.subr.mxu0 0.0
    %1692 = vmatpush1.msra.mxu0 0.0
    %1693 = vmatprep.subr.mxu0 0.0
    %1694 = vmatpush1.msra.mxu0 0.0
    %1695 = vmatprep.subr.mxu0 0.0
    %1696 = vmatpush1.msra.mxu0 0.0
    %1697 = vmatprep.subr.mxu0 0.0
    %1698 = vmatpush1.msra.mxu0 0.0
    %1699 = vmatprep.subr.mxu0 0.0
    %1700 = vmatpush1.msra.mxu0 0.0
    %1701 = vmatprep.subr.mxu0 0.0
    %1702 = vmatpush1.msra.mxu0 0.0
    %1703 = vmatprep.subr.mxu0 0.0
    %1704 = vmatpush1.msra.mxu0 0.0
    %1705 = vmatprep.subr.mxu0 0.0
    %1706 = vmatpush1.msra.mxu0 0.0
    %1707 = vmatprep.subr.mxu0 0.0
    %1708 = vmatpush1.msra.mxu0 0.0
    %1709 = vmatprep.subr.mxu0 0.0
    %1710 = vmatpush1.msra.mxu0 0.0
    %1711 = vmatprep.subr.mxu0 0.0
    %1712 = vmatpush1.msra.mxu0 0.0
    %1713 = vmatprep.mubr.f32.mxu0 0.0
    %v1714 = vand.u32 %v1483, 4294901760
    %v1715 = vsub.f32 %v1483, %v1714
    %1716 = vmatmul.mubr.f32.gmra.mrb[0].mxu0 %v1715
    %v1717 = vpop.f32.mrb[0].mxu0
    %v1718 = vadd.f32 %v1641, %v1717
    %v1719 = vpop.f32.mrb[0].mxu0
    %v1720 = vadd.f32 %v1643, %v1719
    %1721 = vdwg.mxu0
    %v1722 = vand.u32 %v985, 4294901760
    %1723 = vmatprep.subr.mxu0 %v1722
    %v1724 = vand.u32 %v984, 4294901760
    %1725 = vmatpush1.msra.mxu0 %v1724
    %1726 = vmatprep.subr.mxu0 0.0
    %1727 = vmatpush1.msra.mxu0 0.0
    %1728 = vmatprep.subr.mxu0 0.0
    %1729 = vmatpush1.msra.mxu0 0.0
    %1730 = vmatprep.subr.mxu0 0.0
    %1731 = vmatpush1.msra.mxu0 0.0
    %1732 = vmatprep.subr.mxu0 0.0
    %1733 = vmatpush1.msra.mxu0 0.0
    %1734 = vmatprep.subr.mxu0 0.0
    %1735 = vmatpush1.msra.mxu0 0.0
    %1736 = vmatprep.subr.mxu0 0.0
    %1737 = vmatpush1.msra.mxu0 0.0
    %1738 = vmatprep.subr.mxu0 0.0
    %1739 = vmatpush1.msra.mxu0 0.0
    %1740 = vmatprep.subr.mxu0 0.0
    %1741 = vmatpush1.msra.mxu0 0.0
    %1742 = vmatprep.subr.mxu0 0.0
    %1743 = vmatpush1.msra.mxu0 0.0
    %1744 = vmatprep.subr.mxu0 0.0
    %1745 = vmatpush1.msra.mxu0 0.0
    %1746 = vmatprep.subr.mxu0 0.0
    %1747 = vmatpush1.msra.mxu0 0.0
    %1748 = vmatprep.subr.mxu0 0.0
    %1749 = vmatpush1.msra.mxu0 0.0
    %1750 = vmatprep.subr.mxu0 0.0
    %1751 = vmatpush1.msra.mxu0 0.0
    %1752 = vmatprep.subr.mxu0 0.0
    %1753 = vmatpush1.msra.mxu0 0.0
    %1754 = vmatprep.subr.mxu0 0.0
    %1755 = vmatpush1.msra.mxu0 0.0
    %1756 = vmatprep.subr.mxu0 0.0
    %1757 = vmatpush1.msra.mxu0 0.0
    %1758 = vmatprep.subr.mxu0 0.0
    %1759 = vmatpush1.msra.mxu0 0.0
    %1760 = vmatprep.subr.mxu0 0.0
    %1761 = vmatpush1.msra.mxu0 0.0
    %1762 = vmatprep.subr.mxu0 0.0
    %1763 = vmatpush1.msra.mxu0 0.0
    %1764 = vmatprep.subr.mxu0 0.0
    %1765 = vmatpush1.msra.mxu0 0.0
    %1766 = vmatprep.subr.mxu0 0.0
    %1767 = vmatpush1.msra.mxu0 0.0
    %1768 = vmatprep.subr.mxu0 0.0
    %1769 = vmatpush1.msra.mxu0 0.0
    %1770 = vmatprep.subr.mxu0 0.0
    %1771 = vmatpush1.msra.mxu0 0.0
    %1772 = vmatprep.subr.mxu0 0.0
    %1773 = vmatpush1.msra.mxu0 0.0
    %1774 = vmatprep.subr.mxu0 0.0
    %1775 = vmatpush1.msra.mxu0 0.0
    %1776 = vmatprep.subr.mxu0 0.0
    %1777 = vmatpush1.msra.mxu0 0.0
    %1778 = vmatprep.subr.mxu0 0.0
    %1779 = vmatpush1.msra.mxu0 0.0
    %1780 = vmatprep.subr.mxu0 0.0
    %1781 = vmatpush1.msra.mxu0 0.0
    %1782 = vmatprep.subr.mxu0 0.0
    %1783 = vmatpush1.msra.mxu0 0.0
    %1784 = vmatprep.subr.mxu0 0.0
    %1785 = vmatpush1.msra.mxu0 0.0
    %1786 = vmatprep.subr.mxu0 0.0
    %1787 = vmatpush1.msra.mxu0 0.0
    %1788 = vmatprep.mubr.f32.mxu0 0.0
    %v1789 = vand.u32 %v1483, 4294901760
    %v1790 = vsub.f32 %v1483, %v1789
    %v1791 = vand.u32 %v1790, 4294901760
    %1792 = vmatmul.mubr.f32.gmra.mrb[0].mxu0 %v1791
    %v1793 = vpop.f32.mrb[0].mxu0
    %v1794 = vadd.f32 %v1718, %v1793
    %v1795 = vpop.f32.mrb[0].mxu0
    %v1796 = vadd.f32 %v1720, %v1795
    %1797 = vdwg.mxu0
    %v1798 = vand.u32 %v985, 4294901760
    %v1799 = vsub.f32 %v985, %v1798
    %v1800 = vand.u32 %v1799, 4294901760
    %1801 = vmatprep.subr.mxu0 %v1800
    %v1802 = vand.u32 %v984, 4294901760
    %v1803 = vsub.f32 %v984, %v1802
    %v1804 = vand.u32 %v1803, 4294901760
    %1805 = vmatpush1.msra.mxu0 %v1804
    %1806 = vmatprep.subr.mxu0 0.0
    %1807 = vmatpush1.msra.mxu0 0.0
    %1808 = vmatprep.subr.mxu0 0.0
    %1809 = vmatpush1.msra.mxu0 0.0
    %1810 = vmatprep.subr.mxu0 0.0
    %1811 = vmatpush1.msra.mxu0 0.0
    %1812 = vmatprep.subr.mxu0 0.0
    %1813 = vmatpush1.msra.mxu0 0.0
    %1814 = vmatprep.subr.mxu0 0.0
    %1815 = vmatpush1.msra.mxu0 0.0
    %1816 = vmatprep.subr.mxu0 0.0
    %1817 = vmatpush1.msra.mxu0 0.0
    %1818 = vmatprep.subr.mxu0 0.0
    %1819 = vmatpush1.msra.mxu0 0.0
    %1820 = vmatprep.subr.mxu0 0.0
    %1821 = vmatpush1.msra.mxu0 0.0
    %1822 = vmatprep.subr.mxu0 0.0
    %1823 = vmatpush1.msra.mxu0 0.0
    %1824 = vmatprep.subr.mxu0 0.0
    %1825 = vmatpush1.msra.mxu0 0.0
    %1826 = vmatprep.subr.mxu0 0.0
    %1827 = vmatpush1.msra.mxu0 0.0
    %1828 = vmatprep.subr.mxu0 0.0
    %1829 = vmatpush1.msra.mxu0 0.0
    %1830 = vmatprep.subr.mxu0 0.0
    %1831 = vmatpush1.msra.mxu0 0.0
    %1832 = vmatprep.subr.mxu0 0.0
    %1833 = vmatpush1.msra.mxu0 0.0
    %1834 = vmatprep.subr.mxu0 0.0
    %1835 = vmatpush1.msra.mxu0 0.0
    %1836 = vmatprep.subr.mxu0 0.0
    %1837 = vmatpush1.msra.mxu0 0.0
    %1838 = vmatprep.subr.mxu0 0.0
    %1839 = vmatpush1.msra.mxu0 0.0
    %1840 = vmatprep.subr.mxu0 0.0
    %1841 = vmatpush1.msra.mxu0 0.0
    %1842 = vmatprep.subr.mxu0 0.0
    %1843 = vmatpush1.msra.mxu0 0.0
    %1844 = vmatprep.subr.mxu0 0.0
    %1845 = vmatpush1.msra.mxu0 0.0
    %1846 = vmatprep.subr.mxu0 0.0
    %1847 = vmatpush1.msra.mxu0 0.0
    %1848 = vmatprep.subr.mxu0 0.0
    %1849 = vmatpush1.msra.mxu0 0.0
    %1850 = vmatprep.subr.mxu0 0.0
    %1851 = vmatpush1.msra.mxu0 0.0
    %1852 = vmatprep.subr.mxu0 0.0
    %1853 = vmatpush1.msra.mxu0 0.0
    %1854 = vmatprep.subr.mxu0 0.0
    %1855 = vmatpush1.msra.mxu0 0.0
    %1856 = vmatprep.subr.mxu0 0.0
    %1857 = vmatpush1.msra.mxu0 0.0
    %1858 = vmatprep.subr.mxu0 0.0
    %1859 = vmatpush1.msra.mxu0 0.0
    %1860 = vmatprep.subr.mxu0 0.0
    %1861 = vmatpush1.msra.mxu0 0.0
    %1862 = vmatprep.subr.mxu0 0.0
    %1863 = vmatpush1.msra.mxu0 0.0
    %1864 = vmatprep.subr.mxu0 0.0
    %1865 = vmatpush1.msra.mxu0 0.0
    %1866 = vmatprep.subr.mxu0 0.0
    %1867 = vmatpush1.msra.mxu0 0.0
    %1868 = vmatprep.mubr.f32.mxu0 0.0
    %v1869 = vand.u32 %v1483, 4294901760
    %1870 = vmatmul.mubr.f32.gmra.mrb[0].mxu0 %v1869
    %v1871 = vpop.f32.mrb[0].mxu0
    %v1872 = vadd.f32 %v1794, %v1871
    %v1873 = vpop.f32.mrb[0].mxu0
    %v1874 = vadd.f32 %v1796, %v1873
    %1875 = vdwg.mxu0
    %v1876 = vand.u32 %v985, 4294901760
    %1877 = vmatprep.subr.mxu0 %v1876
    %v1878 = vand.u32 %v984, 4294901760
    %1879 = vmatpush1.msra.mxu0 %v1878
    %1880 = vmatprep.subr.mxu0 0.0
    %1881 = vmatpush1.msra.mxu0 0.0
    %1882 = vmatprep.subr.mxu0 0.0
    %1883 = vmatpush1.msra.mxu0 0.0
    %1884 = vmatprep.subr.mxu0 0.0
    %1885 = vmatpush1.msra.mxu0 0.0
    %1886 = vmatprep.subr.mxu0 0.0
    %1887 = vmatpush1.msra.mxu0 0.0
    %1888 = vmatprep.subr.mxu0 0.0
    %1889 = vmatpush1.msra.mxu0 0.0
    %1890 = vmatprep.subr.mxu0 0.0
    %1891 = vmatpush1.msra.mxu0 0.0
    %1892 = vmatprep.subr.mxu0 0.0
    %1893 = vmatpush1.msra.mxu0 0.0
    %1894 = vmatprep.subr.mxu0 0.0
    %1895 = vmatpush1.msra.mxu0 0.0
    %1896 = vmatprep.subr.mxu0 0.0
    %1897 = vmatpush1.msra.mxu0 0.0
    %1898 = vmatprep.subr.mxu0 0.0
    %1899 = vmatpush1.msra.mxu0 0.0
    %1900 = vmatprep.subr.mxu0 0.0
    %1901 = vmatpush1.msra.mxu0 0.0
    %1902 = vmatprep.subr.mxu0 0.0
    %1903 = vmatpush1.msra.mxu0 0.0
    %1904 = vmatprep.subr.mxu0 0.0
    %1905 = vmatpush1.msra.mxu0 0.0
    %1906 = vmatprep.subr.mxu0 0.0
    %1907 = vmatpush1.msra.mxu0 0.0
    %1908 = vmatprep.subr.mxu0 0.0
    %1909 = vmatpush1.msra.mxu0 0.0
    %1910 = vmatprep.subr.mxu0 0.0
    %1911 = vmatpush1.msra.mxu0 0.0
    %1912 = vmatprep.subr.mxu0 0.0
    %1913 = vmatpush1.msra.mxu0 0.0
    %1914 = vmatprep.subr.mxu0 0.0
    %1915 = vmatpush1.msra.mxu0 0.0
    %1916 = vmatprep.subr.mxu0 0.0
    %1917 = vmatpush1.msra.mxu0 0.0
    %1918 = vmatprep.subr.mxu0 0.0
    %1919 = vmatpush1.msra.mxu0 0.0
    %1920 = vmatprep.subr.mxu0 0.0
    %1921 = vmatpush1.msra.mxu0 0.0
    %1922 = vmatprep.subr.mxu0 0.0
    %1923 = vmatpush1.msra.mxu0 0.0
    %1924 = vmatprep.subr.mxu0 0.0
    %1925 = vmatpush1.msra.mxu0 0.0
    %1926 = vmatprep.subr.mxu0 0.0
    %1927 = vmatpush1.msra.mxu0 0.0
    %1928 = vmatprep.subr.mxu0 0.0
    %1929 = vmatpush1.msra.mxu0 0.0
    %1930 = vmatprep.subr.mxu0 0.0
    %1931 = vmatpush1.msra.mxu0 0.0
    %1932 = vmatprep.subr.mxu0 0.0
    %1933 = vmatpush1.msra.mxu0 0.0
    %1934 = vmatprep.subr.mxu0 0.0
    %1935 = vmatpush1.msra.mxu0 0.0
    %1936 = vmatprep.subr.mxu0 0.0
    %1937 = vmatpush1.msra.mxu0 0.0
    %1938 = vmatprep.subr.mxu0 0.0
    %1939 = vmatpush1.msra.mxu0 0.0
    %1940 = vmatprep.subr.mxu0 0.0
    %1941 = vmatpush1.msra.mxu0 0.0
    %1942 = vmatprep.mubr.f32.mxu0 0.0
    %v1943 = vand.u32 %v1483, 4294901760
    %1944 = vmatmul.mubr.f32.gmra.mrb[0].mxu0 %v1943
    %v1945 = vpop.f32.mrb[0].mxu0
    %v1946 = vadd.f32 %v1872, %v1945
    %v1947 = vpop.f32.mrb[0].mxu0
    %v1948 = vadd.f32 %v1874, %v1947
    %1949 = vdwg.mxu0
    %1950 = vst [vmem:[#allocation2] sm:$0xff] %v1946
    %1951 = vst [vmem:[#allocation2 + $0x8] sm:$0xff] %v1948
    %v1952 = vmul.f32 %v1946, 0.5
    %v1953 = vmul.f32 %v1948, 0.5
    %v1954 = vmul.f32 %v1952, 1.442695
    %v1955 = vpow.pop %v1954
    %v1956 = vmul.f32 %v1953, 1.442695
    %v1957 = vpow.pop %v1956
    %1959 = vrot.lane.b32.xlu0 %v978, 32
    %v1960 = vpop.permute.xlu0 %1959
    %1962 = vrot.lane.b32.xlu0 %v978, 64
    %v1963 = vpop.permute.xlu0 %1962
    %1965 = vrot.lane.b32.xlu0 %v978, 96
    %v1966 = vpop.permute.xlu0 %1965
    %v1968 = vsel %vm981, %v978, %v1960
    %vm1969 = vcmask 523264
    %v1970 = vsel %vm1969, %v1968, %v1963
    %vm1971 = vcmask 785408
    %v1972 = vsel %vm1971, %v1970, %v1966
    %v1973 = vmul.f32 %v1955, %v1972
    %v1974 = vmul.f32 %v1957, %v1972
    %v1975 = vmul.f32 %v509, %v978
    %v1976 = vsel %vm981, %v1975, 0.0
    %1977 = vadd.xlane.f32.xlu0 %v1976
    %v1978 = vpop.xlane.xlu0 %1977
    %1979 = vmatprep.subr.mxu0 0.0
    %1980 = vmatpush1.msra.mxu0 %v986
    %1981 = vmatprep.subr.mxu0 0.0
    %1982 = vmatpush1.msra.mxu0 %v987
    %1983 = vmatprep.subr.mxu0 0.0
    %1984 = vmatpush1.msra.mxu0 %v988
    %1985 = vmatprep.subr.mxu0 0.0
    %1986 = vmatpush1.msra.mxu0 %v989
    %1987 = vmatprep.subr.mxu0 0.0
    %1988 = vmatpush1.msra.mxu0 %v990
    %1989 = vmatprep.subr.mxu0 0.0
    %1990 = vmatpush1.msra.mxu0 %v991
    %1991 = vmatprep.subr.mxu0 0.0
    %1992 = vmatpush1.msra.mxu0 %v992
    %1993 = vmatprep.subr.mxu0 0.0
    %1994 = vmatpush1.msra.mxu0 %v993
    %1995 = vmatprep.subr.mxu0 0.0
    %1996 = vmatpush1.msra.mxu0 %v994
    %1997 = vmatprep.subr.mxu0 0.0
    %1998 = vmatpush1.msra.mxu0 %v995
    %1999 = vmatprep.subr.mxu0 0.0
    %2000 = vmatpush1.msra.mxu0 %v996
    %2001 = vmatprep.subr.mxu0 0.0
    %2002 = vmatpush1.msra.mxu0 %v997
    %2003 = vmatprep.subr.mxu0 0.0
    %2004 = vmatpush1.msra.mxu0 %v998
    %2005 = vmatprep.subr.mxu0 0.0
    %2006 = vmatpush1.msra.mxu0 %v999
    %2007 = vmatprep.subr.mxu0 0.0
    %2008 = vmatpush1.msra.mxu0 %v1000
    %2009 = vmatprep.subr.mxu0 0.0
    %2010 = vmatpush1.msra.mxu0 %v1001
    %2011 = vmatprep.subr.mxu0 0.0
    %2012 = vmatpush1.msra.mxu0 %v1002
    %2013 = vmatprep.subr.mxu0 0.0
    %2014 = vmatpush1.msra.mxu0 %v1003
    %2015 = vmatprep.subr.mxu0 0.0
    %2016 = vmatpush1.msra.mxu0 %v1004
    %2017 = vmatprep.subr.mxu0 0.0
    %2018 = vmatpush1.msra.mxu0 %v1005
    %2019 = vmatprep.subr.mxu0 0.0
    %2020 = vmatpush1.msra.mxu0 %v1006
    %2021 = vmatprep.subr.mxu0 0.0
    %2022 = vmatpush1.msra.mxu0 %v1007
    %2023 = vmatprep.subr.mxu0 0.0
    %2024 = vmatpush1.msra.mxu0 %v1008
    %2025 = vmatprep.subr.mxu0 0.0
    %2026 = vmatpush1.msra.mxu0 %v1009
    %2027 = vmatprep.subr.mxu0 0.0
    %2028 = vmatpush1.msra.mxu0 %v1010
    %2029 = vmatprep.subr.mxu0 0.0
    %2030 = vmatpush1.msra.mxu0 %v1011
    %2031 = vmatprep.subr.mxu0 0.0
    %2032 = vmatpush1.msra.mxu0 %v1012
    %2033 = vmatprep.subr.mxu0 0.0
    %2034 = vmatpush1.msra.mxu0 %v1013
    %2035 = vmatprep.subr.mxu0 0.0
    %2036 = vmatpush1.msra.mxu0 %v1014
    %2037 = vmatprep.subr.mxu0 0.0
    %2038 = vmatpush1.msra.mxu0 %v1015
    %2039 = vmatprep.subr.mxu0 0.0
    %2040 = vmatpush1.msra.mxu0 %v1016
    %2041 = vmatprep.subr.mxu0 0.0
    %2042 = vmatpush1.msra.mxu0 %v1017
    %2043 = vmatprep.mubr.f32.mxu0 %v1974
    %2044 = vmatmul.mubr.f32.gmra.mrb[0].mxu0 %v1973
    %v2045 = vpop.f32.mrb[0].mxu0
    %v2046 = vadd.f32 %v1978, %v2045
    %v2047 = vpop.f32.mrb[0].mxu0
    %2048 = vdwg.mxu0
    %v2049 = vmax.f32 %v2046, 0.0
    %v2050 = vand.u32 2147483647, %v2046
    %v2051 = vsub.f32 0.0, %v2050
    %v2052 = vmul.f32 %v2051, 1.442695
    %v2053 = vpow.pop %v2052
    %v2054 = vadd.f32 %v2053, 1.0
    %v2055 = vlog2.pop %v2054
    %v2056 = vmul.f32 %v2055, 0.6931472
    %v2057 = vadd.f32 %v2049, %v2056
    %v2058 = vsub.f32 0.0, %v2057
    %v2059 = vmax.f32 %v2058, -92.1034
    %v2060 = vsel %vm1470, %v2059, 0.0
    %2061 = vadd.xlane.f32.xlu0 %v2060
    %v2062 = vpop.xlane.xlu0 %2061
    %v2063 = vadd.f32 %v2062, -1.0
    %v2064 = vrcp.pop %v2063
    %v2065 = vmul.f32 -1.0, %v2064
    %v2066 = vsub.f32 1.0, %v2065
    %vm2067 = vcmask 7168
    %2068 = vst.msk [vmem:[%s8] sm:$0xff] %vm2067, %v2066
    // Predicated region
    $region30: #{tpu_custom_call.1} parent=1 // pred_check
      _
    $region31: #{tpu_custom_call.1} parent=1 // pred_check_branch
      %2070 = sbr.rel (0) target = $region33
    $region32: #{tpu_custom_call.1} parent=1 // pred_region
      %s2072 = ssub.s32 256, 256
      %2073 = vsyncadd [#allocation3], %s2072
      %s2075 = sshll.u32 [#allocation2], 4
      %s2076 = int_to_ptr.vmem [resolvable:$true] %s2075
      %2078 = dma.vmem_to_hbm [thread:$0]  %s2076, 256, %s7, [#allocation3]
    $region33: #{tpu_custom_call.1} parent=1 // pred_fallthru
      _
    // Predicated region
    $region34: #{tpu_custom_call.1} parent=1 // pred_check
      _
    $region35: #{tpu_custom_call.1} parent=1 // pred_check_branch
      %2080 = sbr.rel (0) target = $region37
    $region36: #{tpu_custom_call.1} parent=1 // pred_region
      _
    $region37: #{tpu_custom_call.1} parent=1 // pred_fallthru
      _
    // Predicated region
    $region38: #{tpu_custom_call.1} parent=1 // pred_check
      _
    $region39: #{tpu_custom_call.1} parent=1 // pred_check_branch
      %2082 = sbr.rel (0) target = $region41
    $region40: #{tpu_custom_call.1} parent=1 // pred_region
      %s2084 = ssub.s32 128, 128
      %2085 = vsyncadd [#allocation5], %s2084
      %s2087 = sshll.u32 [#allocation4], 4
      %s2088 = int_to_ptr.vmem [resolvable:$true] %s2087
      %2090 = dma.vmem_to_hbm [thread:$0]  %s2088, 128, %s9, [#allocation5]
    $region41: #{tpu_custom_call.1} parent=1 // pred_fallthru
      _
    // Predicated region
    $region42: #{tpu_custom_call.1} parent=1 // pred_check
      _
    $region43: #{tpu_custom_call.1} parent=1 // pred_check_branch
      %2092 = sbr.rel (0) target = $region45
    $region44: #{tpu_custom_call.1} parent=1 // pred_region
      %2093 = dma.done [#allocation3], 256
    $region45: #{tpu_custom_call.1} parent=1 // pred_fallthru
      _
    // Predicated region
    $region46: #{tpu_custom_call.1} parent=1 // pred_check
      _
    $region47: #{tpu_custom_call.1} parent=1 // pred_check_branch
      %2095 = sbr.rel (0) target = $region49
    $region48: #{tpu_custom_call.1} parent=1 // pred_region
      _
    $region49: #{tpu_custom_call.1} parent=1 // pred_fallthru
      _
    // Predicated region
    $region50: #{tpu_custom_call.1} parent=1 // pred_check
      _
    $region51: #{tpu_custom_call.1} parent=1 // pred_check_branch
      %2097 = sbr.rel (0) target = $region53
    $region52: #{tpu_custom_call.1} parent=1 // pred_region
      %2098 = dma.done [#allocation5], 128
    $region53: #{tpu_custom_call.1} parent=1 // pred_fallthru
      _
    %2099 = vsyncpa [#allocation3], 1
    %2100 = vsyncpa [#allocation5], 1

</llo_original>
